<compile_context>
chip_gen: v5e
topology: v5e:2x2
jax: 0.10.0
libtpu: 0.0.40
codegen_flags: <defaults>
</compile_context>

<pallas_src>
import jax
import jax.numpy as jnp
import numpy as np
from jax.experimental import pallas as pl
from jax.experimental.pallas import tpu as pltpu


def _conv_bn_lrelu_kernel(x_ref, w_ref, shift_ref, out_ref, xp_ref, pm_ref):
    # x_ref:     (1, H, W, Cin)      input image (NHWC, channels on lanes)
    # w_ref:     (Cout, 9*Cin)       BN-scale-folded weights, col order (dy, dx, ci)
    # shift_ref: (Cout, 1)           folded conv-bias + BN shift
    # out_ref:   (1, Cout, H*W)      channel-major, lane-dense output
    # xp_ref:    VMEM (H+2, W+2, Cin) scratch: reflect-padded image
    # pm_ref:    VMEM (H*W, 9*Cin)    scratch: im2col patch matrix
    H, W, Cin = x_ref.shape[1], x_ref.shape[2], x_ref.shape[3]
    Cout = out_ref.shape[1]

    x = x_ref[...][0]                                         # (H, W, Cin)

    # ---- reflect pad (PyTorch padding_mode='reflect', pad=1) into scratch ----
    xp_ref[1:H + 1, 1:W + 1, :] = x                           # interior
    xp_ref[0:1, 1:W + 1, :] = x[1:2, :, :]                    # top    <- row 1
    xp_ref[H + 1:H + 2, 1:W + 1, :] = x[H - 2:H - 1, :, :]    # bottom <- row H-2
    xp_ref[:, 0:1, :] = xp_ref[:, 2:3, :]                     # left   <- orig col 1
    xp_ref[:, W + 1:W + 2, :] = xp_ref[:, W - 1:W, :]         # right  <- orig col W-2

    # ---- im2col: pack the 9 shifted windows along the channel axis ----
    xp = xp_ref[...]                                          # (H+2, W+2, Cin)
    for t in range(9):
        dy, dx = t // 3, t % 3
        pm_ref[:, t * Cin:(t + 1) * Cin] = (
            xp[dy:dy + H, dx:dx + W, :].reshape(H * W, Cin))

    # ---- single MXU matmul: (Cout, 9Cin) . (H*W, 9Cin)^T -> (Cout, H*W) ----
    y = jax.lax.dot_general(
        w_ref[...], pm_ref[...],
        dimension_numbers=(((1,), (1,)), ((), ())),           # transposed-rhs contraction
        preferred_element_type=jnp.float32)                   # (Cout, H*W)
    y = y + shift_ref[...]                                    # fused conv bias + BN
    y = jnp.maximum(y, 0.1 * y)                               # LeakyReLU(0.1)
    out_ref[...] = y.reshape(1, Cout, H * W).astype(out_ref.dtype)


def basic_block_x1(x_nchw, params):
    """x_nchw: (N, Cin, H, W) float32 -> (N, Cout, H, W) float32 (eval mode)."""
    N, Cin, H, W = x_nchw.shape
    w_t, shift = params["w_t"], params["shift"]
    Cout = w_t.shape[0]

    # dropout (p=0.05): identity in eval mode.
    x_nhwc = jnp.transpose(x_nchw, (0, 2, 3, 1))              # NCHW -> NHWC

    out = pl.pallas_call(
        _conv_bn_lrelu_kernel,
        out_shape=jax.ShapeDtypeStruct((N, Cout, H * W), jnp.float32),
        grid=(N,),
        in_specs=[
            pl.BlockSpec((1, H, W, Cin), lambda n: (n, 0, 0, 0)),
            pl.BlockSpec((Cout, 9 * Cin), lambda n: (0, 0)),
            pl.BlockSpec((Cout, 1), lambda n: (0, 0)),
        ],
        out_specs=pl.BlockSpec((1, Cout, H * W), lambda n: (n, 0, 0)),
        scratch_shapes=[
            pltpu.VMEM((H + 2, W + 2, Cin), jnp.float32),     # padded image
            pltpu.VMEM((H * W, 9 * Cin), jnp.float32),        # im2col matrix
        ],
        compiler_params=pltpu.CompilerParams(
            dimension_semantics=("parallel",)),
    )(x_nhwc, w_t, shift)

    # dropout2d (p=0.05): identity in eval mode.
    # (N, Cout, H*W) -> (N, Cout, H, W): contiguous reshape, no transpose needed.
    return out.reshape(N, Cout, H, W)


def init_params(key, in_channels, out_channels):
    """Deterministic synthetic raw parameters (HWIO conv weight, eval-mode BN)."""
    ks = jax.random.split(key, 6)
    fan_in = in_channels * 9
    bound = 1.0 / np.sqrt(fan_in)
    w = jax.random.uniform(ks[0], (3, 3, in_channels, out_channels),
                           jnp.float32, -bound, bound)
    b = jax.random.uniform(ks[1], (out_channels,), jnp.float32, -bound, bound)
    gamma = 1.0 + 0.1 * jax.random.normal(ks[2], (out_channels,), jnp.float32)
    beta = 0.1 * jax.random.normal(ks[3], (out_channels,), jnp.float32)
    mean = 0.1 * jax.random.normal(ks[4], (out_channels,), jnp.float32)
    var = jax.random.uniform(ks[5], (out_channels,), jnp.float32, 0.5, 1.5)
    return dict(w=w, b=b, gamma=gamma, beta=beta, mean=mean, var=var)


def fold_params(raw, eps=1e-5):
    """Fold eval-mode BN + conv bias into a (Cout, 9*Cin) weight and (Cout, 1) shift."""
    scale = raw["gamma"] / jnp.sqrt(raw["var"] + eps)                  # (Cout,)
    shift = raw["beta"] + scale * (raw["b"] - raw["mean"])             # (Cout,)
    w_folded = raw["w"] * scale[None, None, None, :]                   # (3,3,Cin,Cout)
    cout = raw["w"].shape[-1]
    w_t = jnp.transpose(w_folded.reshape(-1, cout))                    # (Cout, 9*Cin)
    return dict(w_t=w_t, shift=shift.reshape(-1, 1))


def _reference(x_nchw, raw, eps=1e-5):
    """Pure-JAX reference (lax.conv, unfused BN) for correctness checking."""
    x = jnp.transpose(x_nchw, (0, 2, 3, 1))
    xp = jnp.pad(x, ((0, 0), (1, 1), (1, 1), (0, 0)), mode="reflect")
    y = jax.lax.conv_general_dilated(
        xp, raw["w"], window_strides=(1, 1), padding="VALID",
        dimension_numbers=("NHWC", "HWIO", "NHWC")) + raw["b"]
    y = (y - raw["mean"]) * (raw["gamma"] / jnp.sqrt(raw["var"] + eps)) + raw["beta"]
    y = jnp.where(y >= 0.0, y, 0.1 * y)
    return jnp.transpose(y, (0, 3, 1, 2))


if __name__ == "__main__":
    key = jax.random.PRNGKey(0)
    k_x, k_p = jax.random.split(key)

    N, Cin, Cout, H, W = 2, 4, 8, 16, 16
    x = jax.random.normal(k_x, (N, Cin, H, W), jnp.float32)
    raw = init_params(k_p, Cin, Cout)
    params = fold_params(raw)

    out = jax.block_until_ready(basic_block_x1(x, params))
    ref = jax.block_until_ready(_reference(x, raw))

    assert out.shape == (N, Cout, H, W)
    np.testing.assert_allclose(np.asarray(out), np.asarray(ref),
                               rtol=1e-4, atol=1e-4)
    print("KERNEL_OK")
</pallas_src>

<mosaic_0001>
module attributes {stable_mosaic.version = 11 : i64} {
  func.func @_conv_bn_lrelu_kernel(%arg0: i32, %arg1: memref<1x16x16x4xf32, #tpu.memory_space<vmem>>, %arg2: memref<8x36xf32, #tpu.memory_space<vmem>>, %arg3: memref<8x1xf32, #tpu.memory_space<vmem>>, %arg4: memref<1x8x256xf32, #tpu.memory_space<vmem>>, %arg5: memref<18x18x4xf32, #tpu.memory_space<vmem>>, %arg6: memref<256x36xf32, #tpu.memory_space<vmem>>) attributes {dimension_semantics = [#tpu.dimension_semantics<parallel>], iteration_bounds = array<i64: 2>, scalar_prefetch = 0 : i64, scratch_operands = 2 : i64, tpu.core_type = #tpu.core_type<tc>, window_params = [{transform_indices = @transform_0, window_bounds = array<i64: 1, 16, 16, 4>}, {pipeline_mode = #tpu.pipeline_mode<synchronous>, transform_indices = @transform_1, window_bounds = array<i64: 8, 36>}, {pipeline_mode = #tpu.pipeline_mode<synchronous>, transform_indices = @transform_2, window_bounds = array<i64: 8, 1>}, {transform_indices = @transform_3, window_bounds = array<i64: 1, 8, 256>}]} {
    %c0 = arith.constant 0 : index
    %c0_0 = arith.constant 0 : index
    %c0_1 = arith.constant 0 : index
    %c0_2 = arith.constant 0 : index
    %0 = vector.load %arg1[%c0, %c0_0, %c0_1, %c0_2] : memref<1x16x16x4xf32, #tpu.memory_space<vmem>>, vector<1x16x16x4xf32>
    %1 = vector.shape_cast %0 : vector<1x16x16x4xf32> to vector<16x16x4xf32>
    %c1 = arith.constant 1 : index
    %c1_3 = arith.constant 1 : index
    %c0_4 = arith.constant 0 : index
    %2 = vector.load %arg5[%c1, %c1_3, %c0_4] : memref<18x18x4xf32, #tpu.memory_space<vmem>>, vector<16x16x4xf32>
    tpu.vector_store %arg5[%c1, %c1_3, %c0_4], %1 {strides = array<i32>} : memref<18x18x4xf32, #tpu.memory_space<vmem>>, vector<16x16x4xf32>,
    %3 = vector.extract_strided_slice %1 {offsets = [1, 0, 0], sizes = [1, 16, 4], strides = [1, 1, 1]} : vector<16x16x4xf32> to vector<1x16x4xf32>
    %c0_5 = arith.constant 0 : index
    %c1_6 = arith.constant 1 : index
    %c0_7 = arith.constant 0 : index
    %4 = vector.load %arg5[%c0_5, %c1_6, %c0_7] : memref<18x18x4xf32, #tpu.memory_space<vmem>>, vector<1x16x4xf32>
    tpu.vector_store %arg5[%c0_5, %c1_6, %c0_7], %3 {strides = array<i32>} : memref<18x18x4xf32, #tpu.memory_space<vmem>>, vector<1x16x4xf32>,
    %5 = vector.extract_strided_slice %1 {offsets = [14, 0, 0], sizes = [1, 16, 4], strides = [1, 1, 1]} : vector<16x16x4xf32> to vector<1x16x4xf32>
    %c17 = arith.constant 17 : index
    %c1_8 = arith.constant 1 : index
    %c0_9 = arith.constant 0 : index
    %6 = vector.load %arg5[%c17, %c1_8, %c0_9] : memref<18x18x4xf32, #tpu.memory_space<vmem>>, vector<1x16x4xf32>
    tpu.vector_store %arg5[%c17, %c1_8, %c0_9], %5 {strides = array<i32>} : memref<18x18x4xf32, #tpu.memory_space<vmem>>, vector<1x16x4xf32>,
    %c0_10 = arith.constant 0 : index
    %c2 = arith.constant 2 : index
    %c0_11 = arith.constant 0 : index
    %7 = vector.load %arg5[%c0_10, %c2, %c0_11] : memref<18x18x4xf32, #tpu.memory_space<vmem>>, vector<18x1x4xf32>
    %c0_12 = arith.constant 0 : index
    %c0_13 = arith.constant 0 : index
    %c0_14 = arith.constant 0 : index
    %8 = vector.load %arg5[%c0_12, %c0_13, %c0_14] : memref<18x18x4xf32, #tpu.memory_space<vmem>>, vector<18x1x4xf32>
    tpu.vector_store %arg5[%c0_12, %c0_13, %c0_14], %7 {strides = array<i32>} : memref<18x18x4xf32, #tpu.memory_space<vmem>>, vector<18x1x4xf32>,
    %c0_15 = arith.constant 0 : index
    %c15 = arith.constant 15 : index
    %c0_16 = arith.constant 0 : index
    %9 = vector.load %arg5[%c0_15, %c15, %c0_16] : memref<18x18x4xf32, #tpu.memory_space<vmem>>, vector<18x1x4xf32>
    %c0_17 = arith.constant 0 : index
    %c17_18 = arith.constant 17 : index
    %c0_19 = arith.constant 0 : index
    %10 = vector.load %arg5[%c0_17, %c17_18, %c0_19] : memref<18x18x4xf32, #tpu.memory_space<vmem>>, vector<18x1x4xf32>
    tpu.vector_store %arg5[%c0_17, %c17_18, %c0_19], %9 {strides = array<i32>} : memref<18x18x4xf32, #tpu.memory_space<vmem>>, vector<18x1x4xf32>,
    %c0_20 = arith.constant 0 : index
    %c0_21 = arith.constant 0 : index
    %c0_22 = arith.constant 0 : index
    %11 = vector.load %arg5[%c0_20, %c0_21, %c0_22] : memref<18x18x4xf32, #tpu.memory_space<vmem>>, vector<18x18x4xf32>
    %12 = vector.extract_strided_slice %11 {offsets = [0, 0, 0], sizes = [16, 16, 4], strides = [1, 1, 1]} : vector<18x18x4xf32> to vector<16x16x4xf32>
    %13 = vector.shape_cast %12 : vector<16x16x4xf32> to vector<256x4xf32>
    %c0_23 = arith.constant 0 : index
    %c0_24 = arith.constant 0 : index
    %14 = vector.load %arg6[%c0_23, %c0_24] : memref<256x36xf32, #tpu.memory_space<vmem>>, vector<256x4xf32>
    tpu.vector_store %arg6[%c0_23, %c0_24], %13 {strides = array<i32>} : memref<256x36xf32, #tpu.memory_space<vmem>>, vector<256x4xf32>,
    %15 = vector.extract_strided_slice %11 {offsets = [0, 1, 0], sizes = [16, 16, 4], strides = [1, 1, 1]} : vector<18x18x4xf32> to vector<16x16x4xf32>
    %16 = vector.shape_cast %15 : vector<16x16x4xf32> to vector<256x4xf32>
    %c0_25 = arith.constant 0 : index
    %c4 = arith.constant 4 : index
    %17 = vector.load %arg6[%c0_25, %c4] : memref<256x36xf32, #tpu.memory_space<vmem>>, vector<256x4xf32>
    tpu.vector_store %arg6[%c0_25, %c4], %16 {strides = array<i32>} : memref<256x36xf32, #tpu.memory_space<vmem>>, vector<256x4xf32>,
    %18 = vector.extract_strided_slice %11 {offsets = [0, 2, 0], sizes = [16, 16, 4], strides = [1, 1, 1]} : vector<18x18x4xf32> to vector<16x16x4xf32>
    %19 = vector.shape_cast %18 : vector<16x16x4xf32> to vector<256x4xf32>
    %c0_26 = arith.constant 0 : index
    %c8 = arith.constant 8 : index
    %20 = vector.load %arg6[%c0_26, %c8] : memref<256x36xf32, #tpu.memory_space<vmem>>, vector<256x4xf32>
    tpu.vector_store %arg6[%c0_26, %c8], %19 {strides = array<i32>} : memref<256x36xf32, #tpu.memory_space<vmem>>, vector<256x4xf32>,
    %21 = vector.extract_strided_slice %11 {offsets = [1, 0, 0], sizes = [16, 16, 4], strides = [1, 1, 1]} : vector<18x18x4xf32> to vector<16x16x4xf32>
    %22 = vector.shape_cast %21 : vector<16x16x4xf32> to vector<256x4xf32>
    %c0_27 = arith.constant 0 : index
    %c12 = arith.constant 12 : index
    %23 = vector.load %arg6[%c0_27, %c12] : memref<256x36xf32, #tpu.memory_space<vmem>>, vector<256x4xf32>
    tpu.vector_store %arg6[%c0_27, %c12], %22 {strides = array<i32>} : memref<256x36xf32, #tpu.memory_space<vmem>>, vector<256x4xf32>,
    %24 = vector.extract_strided_slice %11 {offsets = [1, 1, 0], sizes = [16, 16, 4], strides = [1, 1, 1]} : vector<18x18x4xf32> to vector<16x16x4xf32>
    %25 = vector.shape_cast %24 : vector<16x16x4xf32> to vector<256x4xf32>
    %c0_28 = arith.constant 0 : index
    %c16 = arith.constant 16 : index
    %26 = vector.load %arg6[%c0_28, %c16] : memref<256x36xf32, #tpu.memory_space<vmem>>, vector<256x4xf32>
    tpu.vector_store %arg6[%c0_28, %c16], %25 {strides = array<i32>} : memref<256x36xf32, #tpu.memory_space<vmem>>, vector<256x4xf32>,
    %27 = vector.extract_strided_slice %11 {offsets = [1, 2, 0], sizes = [16, 16, 4], strides = [1, 1, 1]} : vector<18x18x4xf32> to vector<16x16x4xf32>
    %28 = vector.shape_cast %27 : vector<16x16x4xf32> to vector<256x4xf32>
    %c0_29 = arith.constant 0 : index
    %c20 = arith.constant 20 : index
    %29 = vector.load %arg6[%c0_29, %c20] : memref<256x36xf32, #tpu.memory_space<vmem>>, vector<256x4xf32>
    tpu.vector_store %arg6[%c0_29, %c20], %28 {strides = array<i32>} : memref<256x36xf32, #tpu.memory_space<vmem>>, vector<256x4xf32>,
    %30 = vector.extract_strided_slice %11 {offsets = [2, 0, 0], sizes = [16, 16, 4], strides = [1, 1, 1]} : vector<18x18x4xf32> to vector<16x16x4xf32>
    %31 = vector.shape_cast %30 : vector<16x16x4xf32> to vector<256x4xf32>
    %c0_30 = arith.constant 0 : index
    %c24 = arith.constant 24 : index
    %32 = vector.load %arg6[%c0_30, %c24] : memref<256x36xf32, #tpu.memory_space<vmem>>, vector<256x4xf32>
    tpu.vector_store %arg6[%c0_30, %c24], %31 {strides = array<i32>} : memref<256x36xf32, #tpu.memory_space<vmem>>, vector<256x4xf32>,
    %33 = vector.extract_strided_slice %11 {offsets = [2, 1, 0], sizes = [16, 16, 4], strides = [1, 1, 1]} : vector<18x18x4xf32> to vector<16x16x4xf32>
    %34 = vector.shape_cast %33 : vector<16x16x4xf32> to vector<256x4xf32>
    %c0_31 = arith.constant 0 : index
    %c28 = arith.constant 28 : index
    %35 = vector.load %arg6[%c0_31, %c28] : memref<256x36xf32, #tpu.memory_space<vmem>>, vector<256x4xf32>
    tpu.vector_store %arg6[%c0_31, %c28], %34 {strides = array<i32>} : memref<256x36xf32, #tpu.memory_space<vmem>>, vector<256x4xf32>,
    %36 = vector.extract_strided_slice %11 {offsets = [2, 2, 0], sizes = [16, 16, 4], strides = [1, 1, 1]} : vector<18x18x4xf32> to vector<16x16x4xf32>
    %37 = vector.shape_cast %36 : vector<16x16x4xf32> to vector<256x4xf32>
    %c0_32 = arith.constant 0 : index
    %c32 = arith.constant 32 : index
    %38 = vector.load %arg6[%c0_32, %c32] : memref<256x36xf32, #tpu.memory_space<vmem>>, vector<256x4xf32>
    tpu.vector_store %arg6[%c0_32, %c32], %37 {strides = array<i32>} : memref<256x36xf32, #tpu.memory_space<vmem>>, vector<256x4xf32>,
    %c0_33 = arith.constant 0 : index
    %c0_34 = arith.constant 0 : index
    %39 = vector.load %arg2[%c0_33, %c0_34] : memref<8x36xf32, #tpu.memory_space<vmem>>, vector<8x36xf32>
    %c0_35 = arith.constant 0 : index
    %c0_36 = arith.constant 0 : index
    %40 = vector.load %arg6[%c0_35, %c0_36] : memref<256x36xf32, #tpu.memory_space<vmem>>, vector<256x36xf32>
    %cst = arith.constant dense<0.000000e+00> : vector<8x256xf32>
    %41 = tpu.matmul %39, %40, %cst {dimension_numbers = #tpu.dot_dimension_numbers<[1], [1], [0], [0], [0, 0, 1, 0], [], []>} : vector<8x36xf32>, vector<256x36xf32>, vector<8x256xf32> -> vector<8x256xf32>
    %c0_37 = arith.constant 0 : index
    %c0_38 = arith.constant 0 : index
    %42 = vector.load %arg3[%c0_37, %c0_38] : memref<8x1xf32, #tpu.memory_space<vmem>>, vector<8x1xf32>
    %43 = vector.broadcast %42 : vector<8x1xf32> to vector<8x256xf32>
    %44 = arith.addf %41, %43 : vector<8x256xf32>
    %cst_39 = arith.constant 1.000000e-01 : f32
    %45 = vector.broadcast %cst_39 : f32 to vector<8x256xf32>
    %46 = arith.mulf %45, %44 : vector<8x256xf32>
    %47 = arith.maximumf %44, %46 : vector<8x256xf32>
    %48 = vector.shape_cast %47 : vector<8x256xf32> to vector<1x8x256xf32>
    %c0_40 = arith.constant 0 : index
    %c0_41 = arith.constant 0 : index
    %c0_42 = arith.constant 0 : index
    %49 = vector.load %arg4[%c0_40, %c0_41, %c0_42] : memref<1x8x256xf32, #tpu.memory_space<vmem>>, vector<1x8x256xf32>
    tpu.vector_store %arg4[%c0_40, %c0_41, %c0_42], %48 {strides = array<i32>} : memref<1x8x256xf32, #tpu.memory_space<vmem>>, vector<1x8x256xf32>,
    return
  }
  func.func @transform_0(%arg0: i32) -> (i32, i32, i32, i32) {
    %c0_i32 = arith.constant 0 : i32
    %c0_i32_0 = arith.constant 0 : i32
    %c0_i32_1 = arith.constant 0 : i32
    %c0_i32_2 = arith.constant 0 : i32
    return %arg0, %c0_i32, %c0_i32_0, %c0_i32_1 : i32, i32, i32, i32
  }
  func.func @transform_1(%arg0: i32) -> (i32, i32) {
    %c0_i32 = arith.constant 0 : i32
    %c0_i32_0 = arith.constant 0 : i32
    %c0_i32_1 = arith.constant 0 : i32
    return %c0_i32, %c0_i32_0 : i32, i32
  }
  func.func @transform_2(%arg0: i32) -> (i32, i32) {
    %c0_i32 = arith.constant 0 : i32
    %c0_i32_0 = arith.constant 0 : i32
    %c0_i32_1 = arith.constant 0 : i32
    return %c0_i32, %c0_i32_0 : i32, i32
  }
  func.func @transform_3(%arg0: i32) -> (i32, i32, i32) {
    %c0_i32 = arith.constant 0 : i32
    %c0_i32_0 = arith.constant 0 : i32
    %c0_i32_1 = arith.constant 0 : i32
    return %arg0, %c0_i32, %c0_i32_0 : i32, i32, i32
  }
}

</mosaic_0001>

<llo_original>
// kernel: tpu_custom_call.1
$region0: #{tpu_custom_call.1}
  #allocation0 [shape = 'u32[]', space=smem, size = 0x4, offset = 0x4, fixed_abs, tag = 'smem constant byte address 0x4 - core index']
  #allocation1 [shape = 'u32[72,128]{1,0:T(1,128)}', space=vmem, size = 0x9000, scoped, tag = 'internal scratch']
  #allocation2 [shape = 'f32[18,18,4]{2,1,0:T(8,128)}', space=vmem, size = 0x36000, scoped, tag = 'scratch operand']
  #allocation3 [shape = 'f32[256,36]{1,0:T(8,128)}', space=vmem, size = 0x20000, scoped, tag = 'scratch operand']
  %s0 = inlined_call_operand.vmem [shape: f32[2,16,16,4], index: 0, kind: input, shape index: {}]
  %s1 = inlined_call_operand.vmem [shape: f32[8,36], index: 1, kind: input, shape index: {}]
  %s2 = inlined_call_operand.vmem [shape: f32[8,1], index: 2, kind: input, shape index: {}]
  %s3 = inlined_call_operand.hbm [shape: f32[2,8,256], index: 3, kind: output, shape index: {}]
  %s4 = sld [smem:[#allocation0]]
  $region45: #{tpu_custom_call.1} parent=0
    _
  %s6 = ssub.s32 1, %s4
  %s7 = scalar_select 0, %s6, %s4
  $region1: #{tpu_custom_call.1} parent=0
    #allocation4 [shape = 'u8[16384]{0}', space=vmem, size = 0x4000, scoped, tag = 'output window, operand 0']
    #allocation5 [shape = 's32[2]{0}', space=sflag, size = 0x8, scoped, tag = 'scoped memory for tpu_custom_call.1']
    %8 = vsyncpa [#allocation5], 0
    %s9 = scalar_lea.sflag [#allocation5], 1
    %10 = vsyncpa %s9, 0
    loop: start=0, step=1, limit=4
    $region2: #{tpu_custom_call.1} parent=1 // loop_pre_header
      _
    $region3: #{tpu_custom_call.1} parent=1 // loop_header
      %s12 = sphi 0, %s16
      %p13 = scmp.ge.s32.totalorder %s12, 4
      %s22 = sphi 0, %s24
      %s25 = sphi 0, %s22
      %s26 = sphi 0, %s25
      %s42 = sphi 0, %s26
      %s46 = sphi 0, %s46
      %s48 = sphi 0, %s46
      %s49 = sphi 0, %s48
      %s63 = sphi 0, %s49
      %s67 = sphi 0, %s67
      %s69 = sphi 0, %s67
      %s70 = sphi 0, %s69
      %s84 = sphi 0, %s70
      %s90 = sphi 0, %s92
      %s93 = sphi 0, %s90
      %s94 = sphi 0, %s93
      %s110 = sphi 0, %s94
    $region4: #{tpu_custom_call.1} parent=1 // loop_header_branch
      %15 = sbr.rel (%p13) target = $region8
    $region5: #{tpu_custom_call.1} parent=1 // loop_body
      %s17 = ssub.s32 %s12, 1
      %s18 = ssub.s32 %s12, 2
      %s19 = sadd.s32 %s12, 1
      %s20 = ssub.s32 %s12, %s19
      %p21 = scmp.eq.s32.totalorder %s20, 0
      %s23 = sadd.s32 %s22, 1
      %s24 = scalar_select %p21, %s22, %s23
      %p27 = pneg %p21
      %p28 = scmp.eq.s32.totalorder %s12, 1
      %p29 = por %p27, %p28
      %p30 = scmp.ne.s32.totalorder %s22, %s25
      %p31 = scmp.eq.s32.totalorder %s12, 0
      %p32 = por %p30, %p31
      %p33 = scmp.ne.s32.totalorder %s22, %s25
      %p34 = scmp.eq.s32.totalorder %s17, 1
      %p35 = por %p33, %p34
      %p36 = scmp.ne.s32.totalorder %s25, %s26
      %p37 = scmp.eq.s32.totalorder %s17, 0
      %p38 = por %p36, %p37
      %p39 = scmp.ne.s32.totalorder %s25, %s26
      %p40 = scmp.eq.s32.totalorder %s18, 1
      %p41 = por %p39, %p40
      %p43 = scmp.ne.s32.totalorder %s26, %s42
      %p44 = scmp.eq.s32.totalorder %s18, 0
      %p45 = por %p43, %p44
      %s47 = sadd.s32 %s46, 1
      %p50 = scmp.eq.s32.totalorder %s12, 1
      %p51 = scmp.ne.s32.totalorder %s46, %s48
      %p52 = scmp.eq.s32.totalorder %s12, 0
      %p53 = por %p51, %p52
      %p54 = scmp.ne.s32.totalorder %s46, %s48
      %p55 = scmp.eq.s32.totalorder %s17, 1
      %p56 = por %p54, %p55
      %p57 = scmp.ne.s32.totalorder %s48, %s49
      %p58 = scmp.eq.s32.totalorder %s17, 0
      %p59 = por %p57, %p58
      %p60 = scmp.ne.s32.totalorder %s48, %s49
      %p61 = scmp.eq.s32.totalorder %s18, 1
      %p62 = por %p60, %p61
      %p64 = scmp.ne.s32.totalorder %s49, %s63
      %p65 = scmp.eq.s32.totalorder %s18, 0
      %p66 = por %p64, %p65
      %s68 = sadd.s32 %s67, 1
      %p71 = scmp.eq.s32.totalorder %s12, 1
      %p72 = scmp.ne.s32.totalorder %s67, %s69
      %p73 = scmp.eq.s32.totalorder %s12, 0
      %p74 = por %p72, %p73
      %p75 = scmp.ne.s32.totalorder %s67, %s69
      %p76 = scmp.eq.s32.totalorder %s17, 1
      %p77 = por %p75, %p76
      %p78 = scmp.ne.s32.totalorder %s69, %s70
      %p79 = scmp.eq.s32.totalorder %s17, 0
      %p80 = por %p78, %p79
      %p81 = scmp.ne.s32.totalorder %s69, %s70
      %p82 = scmp.eq.s32.totalorder %s18, 1
      %p83 = por %p81, %p82
      %p85 = scmp.ne.s32.totalorder %s70, %s84
      %p86 = scmp.eq.s32.totalorder %s18, 0
      %p87 = por %p85, %p86
      %s88 = ssub.s32 %s12, %s19
      %p89 = scmp.eq.s32.totalorder %s88, 0
      %s91 = sadd.s32 %s90, 1
      %s92 = scalar_select %p89, %s90, %s91
      %p95 = pneg %p89
      %p96 = scmp.eq.s32.totalorder %s12, 1
      %p97 = por %p95, %p96
      %p98 = scmp.ne.s32.totalorder %s90, %s93
      %p99 = scmp.eq.s32.totalorder %s12, 0
      %p100 = por %p98, %p99
      %p101 = scmp.ne.s32.totalorder %s90, %s93
      %p102 = scmp.eq.s32.totalorder %s17, 1
      %p103 = por %p101, %p102
      %p104 = scmp.ne.s32.totalorder %s93, %s94
      %p105 = scmp.eq.s32.totalorder %s17, 0
      %p106 = por %p104, %p105
      %p107 = scmp.ne.s32.totalorder %s93, %s94
      %p108 = scmp.eq.s32.totalorder %s18, 1
      %p109 = por %p107, %p108
      %p111 = scmp.ne.s32.totalorder %s94, %s110
      %p112 = scmp.eq.s32.totalorder %s18, 0
      %p113 = por %p111, %p112
      %p114 = scmp.le.s32.totalorder 1, %s12
      %p115 = scmp.lt.s32.totalorder %s12, 3
      %p116 = pnand %p114, %p115
      %p117 = pneg %p116
      // Predicated region
      $region9: #{tpu_custom_call.1} parent=5 // pred_check
        _
      $region10: #{tpu_custom_call.1} parent=5 // pred_check_branch
        %119 = sbr.rel (%p116) target = $region12
      $region11: #{tpu_custom_call.1} parent=5 // pred_region
        %s120 = ssub.s32 %s12, 1
        // Predicated region
        $region13: #{tpu_custom_call.1} parent=11 // pred_check
          %p121 = pneg %p59
        $region14: #{tpu_custom_call.1} parent=11 // pred_check_branch
          %123 = sbr.rel (%p121) target = $region16
        $region15: #{tpu_custom_call.1} parent=11 // pred_region
          _
        $region16: #{tpu_custom_call.1} parent=11 // pred_fallthru
          _
        // Predicated region
        $region17: #{tpu_custom_call.1} parent=11 // pred_check
          %p124 = pneg %p80
        $region18: #{tpu_custom_call.1} parent=11 // pred_check_branch
          %126 = sbr.rel (%p124) target = $region20
        $region19: #{tpu_custom_call.1} parent=11 // pred_region
          _
        $region20: #{tpu_custom_call.1} parent=11 // pred_fallthru
          _
      $region12: #{tpu_custom_call.1} parent=5 // pred_fallthru
        _
      %p127 = scmp.lt.s32.totalorder %s12, 2
      // Predicated region
      $region21: #{tpu_custom_call.1} parent=5 // pred_check
        %p128 = pneg %p127
      $region22: #{tpu_custom_call.1} parent=5 // pred_check_branch
        %130 = sbr.rel (%p128) target = $region24
      $region23: #{tpu_custom_call.1} parent=5 // pred_region
        // Predicated region
        $region25: #{tpu_custom_call.1} parent=23 // pred_check
          %p131 = pneg %p32
        $region26: #{tpu_custom_call.1} parent=23 // pred_check_branch
          %133 = sbr.rel (%p131) target = $region28
        $region27: #{tpu_custom_call.1} parent=23 // pred_region
          %p134 = scmp.lt.s32.totalorder %s12, 1
          %s135 = scalar_select %p134, %s12, 1
          %s136 = smul.addr %s135, 32
          %s137 = smul.addr %s136, 8
          %s138 = scalar_lea.vmem %s0, %s137
        $region28: #{tpu_custom_call.1} parent=23 // pred_fallthru
          _
      $region24: #{tpu_custom_call.1} parent=5 // pred_fallthru
        _
      %p139 = scmp.le.s32.totalorder 1, %s12
      %p140 = scmp.lt.s32.totalorder %s12, 3
      %p141 = pnand %p139, %p140
      %p142 = pneg %p141
      // Predicated region
      $region29: #{tpu_custom_call.1} parent=5 // pred_check
        _
      $region30: #{tpu_custom_call.1} parent=5 // pred_check_branch
        %144 = sbr.rel (%p141) target = $region32
      $region31: #{tpu_custom_call.1} parent=5 // pred_region
        %s145 = ssub.s32 %s12, 1
        %p146 = scmp.lt.s32.totalorder %s17, 1
        %s147 = scalar_select %p146, %s17, 1
        %s148 = smul.addr %s147, 32
        %s149 = smul.addr %s148, 8
        %s150 = scalar_lea.vmem %s0, %s149
        %p151 = pneg %p38
        %p152 = pneg %p35
        %p153 = pneg %p59
        %p154 = pneg %p56
        %p155 = pneg %p80
        %p156 = pneg %p77
        %p157 = pneg %p106
        %p158 = pneg %p103
        %s159 = sand.u32 %s93, 1
        %s160 = scalar_lea.sflag [#allocation5], %s159
        %s161 = sand.u32 %s93, 1
        %s162 = smul.addr %s161, 16
        %s163 = scalar_lea.vmem [#allocation4], %s162
        %p164 = scmp.lt.s32.totalorder %s17, 1
        %s165 = scalar_select %p164, %s17, 1
        %s166 = smul.addr %s165, 32
        %s167 = smul.addr %s166, 8
        %s168 = scalar_lea.vmem %s0, %s167
        %v169 = vld [vmem:[%s168] sm:$0xff]
        %v170 = vld [vmem:[%s168 + $0x8] sm:$0xff]
        %v171 = vld [vmem:[%s168 + $0x10] sm:$0xff]
        %v172 = vld [vmem:[%s168 + $0x18] sm:$0xff]
        %v173 = vld [vmem:[%s168 + $0x20] sm:$0xff]
        %v174 = vld [vmem:[%s168 + $0x28] sm:$0xff]
        %v175 = vld [vmem:[%s168 + $0x30] sm:$0xff]
        %v176 = vld [vmem:[%s168 + $0x38] sm:$0xff]
        %v177 = vld [vmem:[%s168 + $0x40] sm:$0xff]
        %v178 = vld [vmem:[%s168 + $0x48] sm:$0xff]
        %v179 = vld [vmem:[%s168 + $0x50] sm:$0xff]
        %v180 = vld [vmem:[%s168 + $0x58] sm:$0xff]
        %v181 = vld [vmem:[%s168 + $0x60] sm:$0xff]
        %v182 = vld [vmem:[%s168 + $0x68] sm:$0xff]
        %v183 = vld [vmem:[%s168 + $0x70] sm:$0xff]
        %v184 = vld [vmem:[%s168 + $0x78] sm:$0xff]
        %v185 = vld [vmem:[%s168 + $0x80] sm:$0xff]
        %v186 = vld [vmem:[%s168 + $0x88] sm:$0xff]
        %v187 = vld [vmem:[%s168 + $0x90] sm:$0xff]
        %v188 = vld [vmem:[%s168 + $0x98] sm:$0xff]
        %v189 = vld [vmem:[%s168 + $0xa0] sm:$0xff]
        %v190 = vld [vmem:[%s168 + $0xa8] sm:$0xff]
        %v191 = vld [vmem:[%s168 + $0xb0] sm:$0xff]
        %v192 = vld [vmem:[%s168 + $0xb8] sm:$0xff]
        %v193 = vld [vmem:[%s168 + $0xc0] sm:$0xff]
        %v194 = vld [vmem:[%s168 + $0xc8] sm:$0xff]
        %v195 = vld [vmem:[%s168 + $0xd0] sm:$0xff]
        %v196 = vld [vmem:[%s168 + $0xd8] sm:$0xff]
        %v197 = vld [vmem:[%s168 + $0xe0] sm:$0xff]
        %v198 = vld [vmem:[%s168 + $0xe8] sm:$0xff]
        %v199 = vld [vmem:[%s168 + $0xf0] sm:$0xff]
        %v200 = vld [vmem:[%s168 + $0xf8] sm:$0xff]
        %s201 = scalar_lea.vmem [#allocation2], 24
        %vm202 = vcmask 31744
        %203 = vst.msk [vmem:[%s201 + $0x1] sm:$0xff] %vm202, %v169
        %204 = vst.msk [vmem:[%s201 + $0x9] sm:$0xff] %vm202, %v170
        %205 = vst.msk [vmem:[%s201 + $0x19] sm:$0xff] %vm202, %v171
        %206 = vst.msk [vmem:[%s201 + $0x21] sm:$0xff] %vm202, %v172
        %207 = vst.msk [vmem:[%s201 + $0x31] sm:$0xff] %vm202, %v173
        %208 = vst.msk [vmem:[%s201 + $0x39] sm:$0xff] %vm202, %v174
        %209 = vst.msk [vmem:[%s201 + $0x49] sm:$0xff] %vm202, %v175
        %210 = vst.msk [vmem:[%s201 + $0x51] sm:$0xff] %vm202, %v176
        %211 = vst.msk [vmem:[%s201 + $0x61] sm:$0xff] %vm202, %v177
        %212 = vst.msk [vmem:[%s201 + $0x69] sm:$0xff] %vm202, %v178
        %213 = vst.msk [vmem:[%s201 + $0x79] sm:$0xff] %vm202, %v179
        %214 = vst.msk [vmem:[%s201 + $0x81] sm:$0xff] %vm202, %v180
        %215 = vst.msk [vmem:[%s201 + $0x91] sm:$0xff] %vm202, %v181
        %216 = vst.msk [vmem:[%s201 + $0x99] sm:$0xff] %vm202, %v182
        %217 = vst.msk [vmem:[%s201 + $0xa9] sm:$0xff] %vm202, %v183
        %218 = vst.msk [vmem:[%s201 + $0xb1] sm:$0xff] %vm202, %v184
        %219 = vst.msk [vmem:[%s201 + $0xc1] sm:$0xff] %vm202, %v185
        %220 = vst.msk [vmem:[%s201 + $0xc9] sm:$0xff] %vm202, %v186
        %221 = vst.msk [vmem:[%s201 + $0xd9] sm:$0xff] %vm202, %v187
        %222 = vst.msk [vmem:[%s201 + $0xe1] sm:$0xff] %vm202, %v188
        %223 = vst.msk [vmem:[%s201 + $0xf1] sm:$0xff] %vm202, %v189
        %224 = vst.msk [vmem:[%s201 + $0xf9] sm:$0xff] %vm202, %v190
        %225 = vst.msk [vmem:[%s201 + $0x109] sm:$0xff] %vm202, %v191
        %226 = vst.msk [vmem:[%s201 + $0x111] sm:$0xff] %vm202, %v192
        %227 = vst.msk [vmem:[%s201 + $0x121] sm:$0xff] %vm202, %v193
        %228 = vst.msk [vmem:[%s201 + $0x129] sm:$0xff] %vm202, %v194
        %229 = vst.msk [vmem:[%s201 + $0x139] sm:$0xff] %vm202, %v195
        %230 = vst.msk [vmem:[%s201 + $0x141] sm:$0xff] %vm202, %v196
        %231 = vst.msk [vmem:[%s201 + $0x151] sm:$0xff] %vm202, %v197
        %232 = vst.msk [vmem:[%s201 + $0x159] sm:$0xff] %vm202, %v198
        %233 = vst.msk [vmem:[%s201 + $0x169] sm:$0xff] %vm202, %v199
        %234 = vst.msk [vmem:[%s201 + $0x171] sm:$0xff] %vm202, %v200
        %235 = vst.msk [vmem:[#allocation2 + $0x1] sm:$0xff] %vm202, %v171
        %236 = vst.msk [vmem:[#allocation2 + $0x9] sm:$0xff] %vm202, %v172
        %s237 = scalar_lea.vmem [#allocation2], 408
        %238 = vst.msk [vmem:[%s237 + $0x1] sm:$0xff] %vm202, %v197
        %239 = vst.msk [vmem:[%s237 + $0x9] sm:$0xff] %vm202, %v198
        %v240 = vld [vmem:[#allocation2 + $0x2] sm:$0x1]
        %v241 = vld [vmem:[#allocation2 + $0x1a] sm:$0x1]
        %v242 = vld [vmem:[#allocation2 + $0x32] sm:$0x1]
        %v243 = vld [vmem:[#allocation2 + $0x4a] sm:$0x1]
        %v244 = vld [vmem:[#allocation2 + $0x62] sm:$0x1]
        %v245 = vld [vmem:[#allocation2 + $0x7a] sm:$0x1]
        %v246 = vld [vmem:[#allocation2 + $0x92] sm:$0x1]
        %v247 = vld [vmem:[#allocation2 + $0xaa] sm:$0x1]
        %v248 = vld [vmem:[#allocation2 + $0xc2] sm:$0x1]
        %v249 = vld [vmem:[#allocation2 + $0xda] sm:$0x1]
        %v250 = vld [vmem:[#allocation2 + $0xf2] sm:$0x1]
        %v251 = vld [vmem:[#allocation2 + $0x10a] sm:$0x1]
        %v252 = vld [vmem:[#allocation2 + $0x122] sm:$0x1]
        %v253 = vld [vmem:[#allocation2 + $0x13a] sm:$0x1]
        %v254 = vld [vmem:[#allocation2 + $0x152] sm:$0x1]
        %v255 = vld [vmem:[#allocation2 + $0x16a] sm:$0x1]
        %v256 = vld [vmem:[#allocation2 + $0x182] sm:$0x1]
        %v257 = vld [vmem:[#allocation2 + $0x19a] sm:$0x1]
        %vm258 = vcmask 24576
        %259 = vst.msk [vmem:[#allocation2] sm:$0x1] %vm258, %v240
        %260 = vst.msk [vmem:[#allocation2 + $0x18] sm:$0x1] %vm258, %v241
        %261 = vst.msk [vmem:[#allocation2 + $0x30] sm:$0x1] %vm258, %v242
        %262 = vst.msk [vmem:[#allocation2 + $0x48] sm:$0x1] %vm258, %v243
        %263 = vst.msk [vmem:[#allocation2 + $0x60] sm:$0x1] %vm258, %v244
        %264 = vst.msk [vmem:[#allocation2 + $0x78] sm:$0x1] %vm258, %v245
        %265 = vst.msk [vmem:[#allocation2 + $0x90] sm:$0x1] %vm258, %v246
        %266 = vst.msk [vmem:[#allocation2 + $0xa8] sm:$0x1] %vm258, %v247
        %267 = vst.msk [vmem:[#allocation2 + $0xc0] sm:$0x1] %vm258, %v248
        %268 = vst.msk [vmem:[#allocation2 + $0xd8] sm:$0x1] %vm258, %v249
        %269 = vst.msk [vmem:[#allocation2 + $0xf0] sm:$0x1] %vm258, %v250
        %270 = vst.msk [vmem:[#allocation2 + $0x108] sm:$0x1] %vm258, %v251
        %271 = vst.msk [vmem:[#allocation2 + $0x120] sm:$0x1] %vm258, %v252
        %272 = vst.msk [vmem:[#allocation2 + $0x138] sm:$0x1] %vm258, %v253
        %273 = vst.msk [vmem:[#allocation2 + $0x150] sm:$0x1] %vm258, %v254
        %274 = vst.msk [vmem:[#allocation2 + $0x168] sm:$0x1] %vm258, %v255
        %275 = vst.msk [vmem:[#allocation2 + $0x180] sm:$0x1] %vm258, %v256
        %276 = vst.msk [vmem:[#allocation2 + $0x198] sm:$0x1] %vm258, %v257
        %v277 = vld [vmem:[#allocation2 + $0xf] sm:$0x1]
        %v278 = vld [vmem:[#allocation2 + $0x27] sm:$0x1]
        %v279 = vld [vmem:[#allocation2 + $0x3f] sm:$0x1]
        %v280 = vld [vmem:[#allocation2 + $0x57] sm:$0x1]
        %v281 = vld [vmem:[#allocation2 + $0x6f] sm:$0x1]
        %v282 = vld [vmem:[#allocation2 + $0x87] sm:$0x1]
        %v283 = vld [vmem:[#allocation2 + $0x9f] sm:$0x1]
        %v284 = vld [vmem:[#allocation2 + $0xb7] sm:$0x1]
        %v285 = vld [vmem:[#allocation2 + $0xcf] sm:$0x1]
        %v286 = vld [vmem:[#allocation2 + $0xe7] sm:$0x1]
        %v287 = vld [vmem:[#allocation2 + $0xff] sm:$0x1]
        %v288 = vld [vmem:[#allocation2 + $0x117] sm:$0x1]
        %v289 = vld [vmem:[#allocation2 + $0x12f] sm:$0x1]
        %v290 = vld [vmem:[#allocation2 + $0x147] sm:$0x1]
        %v291 = vld [vmem:[#allocation2 + $0x15f] sm:$0x1]
        %v292 = vld [vmem:[#allocation2 + $0x177] sm:$0x1]
        %v293 = vld [vmem:[#allocation2 + $0x18f] sm:$0x1]
        %v294 = vld [vmem:[#allocation2 + $0x1a7] sm:$0x1]
        %295 = vst.msk [vmem:[#allocation2 + $0x11] sm:$0x1] %vm258, %v277
        %296 = vst.msk [vmem:[#allocation2 + $0x29] sm:$0x1] %vm258, %v278
        %297 = vst.msk [vmem:[#allocation2 + $0x41] sm:$0x1] %vm258, %v279
        %298 = vst.msk [vmem:[#allocation2 + $0x59] sm:$0x1] %vm258, %v280
        %299 = vst.msk [vmem:[#allocation2 + $0x71] sm:$0x1] %vm258, %v281
        %300 = vst.msk [vmem:[#allocation2 + $0x89] sm:$0x1] %vm258, %v282
        %301 = vst.msk [vmem:[#allocation2 + $0xa1] sm:$0x1] %vm258, %v283
        %302 = vst.msk [vmem:[#allocation2 + $0xb9] sm:$0x1] %vm258, %v284
        %303 = vst.msk [vmem:[#allocation2 + $0xd1] sm:$0x1] %vm258, %v285
        %304 = vst.msk [vmem:[#allocation2 + $0xe9] sm:$0x1] %vm258, %v286
        %305 = vst.msk [vmem:[#allocation2 + $0x101] sm:$0x1] %vm258, %v287
        %306 = vst.msk [vmem:[#allocation2 + $0x119] sm:$0x1] %vm258, %v288
        %307 = vst.msk [vmem:[#allocation2 + $0x131] sm:$0x1] %vm258, %v289
        %308 = vst.msk [vmem:[#allocation2 + $0x149] sm:$0x1] %vm258, %v290
        %309 = vst.msk [vmem:[#allocation2 + $0x161] sm:$0x1] %vm258, %v291
        %310 = vst.msk [vmem:[#allocation2 + $0x179] sm:$0x1] %vm258, %v292
        %311 = vst.msk [vmem:[#allocation2 + $0x191] sm:$0x1] %vm258, %v293
        %312 = vst.msk [vmem:[#allocation2 + $0x1a9] sm:$0x1] %vm258, %v294
        %v313 = vld [vmem:[#allocation2] sm:$0xff]
        %v314 = vld [vmem:[#allocation2 + $0x8] sm:$0xff]
        %v315 = vld [vmem:[#allocation2 + $0x10] sm:$0x3]
        %v316 = vld [vmem:[#allocation2 + $0x18] sm:$0xff]
        %v317 = vld [vmem:[#allocation2 + $0x20] sm:$0xff]
        %v318 = vld [vmem:[#allocation2 + $0x28] sm:$0x3]
        %v319 = vld [vmem:[#allocation2 + $0x30] sm:$0xff]
        %v320 = vld [vmem:[#allocation2 + $0x38] sm:$0xff]
        %v321 = vld [vmem:[#allocation2 + $0x40] sm:$0x3]
        %v322 = vld [vmem:[#allocation2 + $0x48] sm:$0xff]
        %v323 = vld [vmem:[#allocation2 + $0x50] sm:$0xff]
        %v324 = vld [vmem:[#allocation2 + $0x58] sm:$0x3]
        %v325 = vld [vmem:[#allocation2 + $0x60] sm:$0xff]
        %v326 = vld [vmem:[#allocation2 + $0x68] sm:$0xff]
        %v327 = vld [vmem:[#allocation2 + $0x70] sm:$0x3]
        %v328 = vld [vmem:[#allocation2 + $0x78] sm:$0xff]
        %v329 = vld [vmem:[#allocation2 + $0x80] sm:$0xff]
        %v330 = vld [vmem:[#allocation2 + $0x88] sm:$0x3]
        %v331 = vld [vmem:[#allocation2 + $0x90] sm:$0xff]
        %v332 = vld [vmem:[#allocation2 + $0x98] sm:$0xff]
        %v333 = vld [vmem:[#allocation2 + $0xa0] sm:$0x3]
        %v334 = vld [vmem:[#allocation2 + $0xa8] sm:$0xff]
        %v335 = vld [vmem:[#allocation2 + $0xb0] sm:$0xff]
        %v336 = vld [vmem:[#allocation2 + $0xb8] sm:$0x3]
        %v337 = vld [vmem:[#allocation2 + $0xc0] sm:$0xff]
        %v338 = vld [vmem:[#allocation2 + $0xc8] sm:$0xff]
        %v339 = vld [vmem:[#allocation2 + $0xd0] sm:$0x3]
        %v340 = vld [vmem:[#allocation2 + $0xd8] sm:$0xff]
        %v341 = vld [vmem:[#allocation2 + $0xe0] sm:$0xff]
        %v342 = vld [vmem:[#allocation2 + $0xe8] sm:$0x3]
        %v343 = vld [vmem:[#allocation2 + $0xf0] sm:$0xff]
        %v344 = vld [vmem:[#allocation2 + $0xf8] sm:$0xff]
        %v345 = vld [vmem:[#allocation2 + $0x100] sm:$0x3]
        %v346 = vld [vmem:[#allocation2 + $0x108] sm:$0xff]
        %v347 = vld [vmem:[#allocation2 + $0x110] sm:$0xff]
        %v348 = vld [vmem:[#allocation2 + $0x118] sm:$0x3]
        %v349 = vld [vmem:[#allocation2 + $0x120] sm:$0xff]
        %v350 = vld [vmem:[#allocation2 + $0x128] sm:$0xff]
        %v351 = vld [vmem:[#allocation2 + $0x130] sm:$0x3]
        %v352 = vld [vmem:[#allocation2 + $0x138] sm:$0xff]
        %v353 = vld [vmem:[#allocation2 + $0x140] sm:$0xff]
        %v354 = vld [vmem:[#allocation2 + $0x148] sm:$0x3]
        %v355 = vld [vmem:[#allocation2 + $0x150] sm:$0xff]
        %v356 = vld [vmem:[#allocation2 + $0x158] sm:$0xff]
        %v357 = vld [vmem:[#allocation2 + $0x160] sm:$0x3]
        %v358 = vld [vmem:[#allocation2 + $0x168] sm:$0xff]
        %v359 = vld [vmem:[#allocation2 + $0x170] sm:$0xff]
        %v360 = vld [vmem:[#allocation2 + $0x178] sm:$0x3]
        %v361 = vld [vmem:[#allocation2 + $0x180] sm:$0xff]
        %v362 = vld [vmem:[#allocation2 + $0x188] sm:$0xff]
        %v363 = vld [vmem:[#allocation2 + $0x190] sm:$0x3]
        %v364 = vld [vmem:[#allocation2 + $0x198] sm:$0xff]
        %v365 = vld [vmem:[#allocation2 + $0x1a0] sm:$0xff]
        %v366 = vld [vmem:[#allocation2 + $0x1a8] sm:$0x3]
        %367 = vst.msk [vmem:[#allocation3] sm:$0xff] %vm202, %v313
        %368 = vst.msk [vmem:[#allocation3 + $0x8] sm:$0xff] %vm202, %v314
        %369 = vst.msk [vmem:[#allocation3 + $0x10] sm:$0xff] %vm202, %v316
        %370 = vst.msk [vmem:[#allocation3 + $0x18] sm:$0xff] %vm202, %v317
        %371 = vst.msk [vmem:[#allocation3 + $0x20] sm:$0xff] %vm202, %v319
        %372 = vst.msk [vmem:[#allocation3 + $0x28] sm:$0xff] %vm202, %v320
        %373 = vst.msk [vmem:[#allocation3 + $0x30] sm:$0xff] %vm202, %v322
        %374 = vst.msk [vmem:[#allocation3 + $0x38] sm:$0xff] %vm202, %v323
        %375 = vst.msk [vmem:[#allocation3 + $0x40] sm:$0xff] %vm202, %v325
        %376 = vst.msk [vmem:[#allocation3 + $0x48] sm:$0xff] %vm202, %v326
        %377 = vst.msk [vmem:[#allocation3 + $0x50] sm:$0xff] %vm202, %v328
        %378 = vst.msk [vmem:[#allocation3 + $0x58] sm:$0xff] %vm202, %v329
        %379 = vst.msk [vmem:[#allocation3 + $0x60] sm:$0xff] %vm202, %v331
        %380 = vst.msk [vmem:[#allocation3 + $0x68] sm:$0xff] %vm202, %v332
        %381 = vst.msk [vmem:[#allocation3 + $0x70] sm:$0xff] %vm202, %v334
        %382 = vst.msk [vmem:[#allocation3 + $0x78] sm:$0xff] %vm202, %v335
        %383 = vst.msk [vmem:[#allocation3 + $0x80] sm:$0xff] %vm202, %v337
        %384 = vst.msk [vmem:[#allocation3 + $0x88] sm:$0xff] %vm202, %v338
        %385 = vst.msk [vmem:[#allocation3 + $0x90] sm:$0xff] %vm202, %v340
        %386 = vst.msk [vmem:[#allocation3 + $0x98] sm:$0xff] %vm202, %v341
        %387 = vst.msk [vmem:[#allocation3 + $0xa0] sm:$0xff] %vm202, %v343
        %388 = vst.msk [vmem:[#allocation3 + $0xa8] sm:$0xff] %vm202, %v344
        %389 = vst.msk [vmem:[#allocation3 + $0xb0] sm:$0xff] %vm202, %v346
        %390 = vst.msk [vmem:[#allocation3 + $0xb8] sm:$0xff] %vm202, %v347
        %391 = vst.msk [vmem:[#allocation3 + $0xc0] sm:$0xff] %vm202, %v349
        %392 = vst.msk [vmem:[#allocation3 + $0xc8] sm:$0xff] %vm202, %v350
        %393 = vst.msk [vmem:[#allocation3 + $0xd0] sm:$0xff] %vm202, %v352
        %394 = vst.msk [vmem:[#allocation3 + $0xd8] sm:$0xff] %vm202, %v353
        %395 = vst.msk [vmem:[#allocation3 + $0xe0] sm:$0xff] %vm202, %v355
        %396 = vst.msk [vmem:[#allocation3 + $0xe8] sm:$0xff] %vm202, %v356
        %397 = vst.msk [vmem:[#allocation3 + $0xf0] sm:$0xff] %vm202, %v358
        %398 = vst.msk [vmem:[#allocation3 + $0xf8] sm:$0xff] %vm202, %v359
        %vm447 = vcmask 1046528
        %v448 = vrot.slane %v313, 1
        %v449 = vrot.slane %v314, 1
        %v450 = vsel %vm447, %v448, %v449
        %v451 = vrot.slane %v315, 1
        %v452 = vsel %vm447, %v449, %v451
        %v453 = vrot.slane %v316, 1
        %v454 = vrot.slane %v317, 1
        %v455 = vsel %vm447, %v453, %v454
        %v456 = vrot.slane %v318, 1
        %v457 = vsel %vm447, %v454, %v456
        %v458 = vrot.slane %v319, 1
        %v459 = vrot.slane %v320, 1
        %v460 = vsel %vm447, %v458, %v459
        %v461 = vrot.slane %v321, 1
        %v462 = vsel %vm447, %v459, %v461
        %v463 = vrot.slane %v322, 1
        %v464 = vrot.slane %v323, 1
        %v465 = vsel %vm447, %v463, %v464
        %v466 = vrot.slane %v324, 1
        %v467 = vsel %vm447, %v464, %v466
        %v468 = vrot.slane %v325, 1
        %v469 = vrot.slane %v326, 1
        %v470 = vsel %vm447, %v468, %v469
        %v471 = vrot.slane %v327, 1
        %v472 = vsel %vm447, %v469, %v471
        %v473 = vrot.slane %v328, 1
        %v474 = vrot.slane %v329, 1
        %v475 = vsel %vm447, %v473, %v474
        %v476 = vrot.slane %v330, 1
        %v477 = vsel %vm447, %v474, %v476
        %v478 = vrot.slane %v331, 1
        %v479 = vrot.slane %v332, 1
        %v480 = vsel %vm447, %v478, %v479
        %v481 = vrot.slane %v333, 1
        %v482 = vsel %vm447, %v479, %v481
        %v483 = vrot.slane %v334, 1
        %v484 = vrot.slane %v335, 1
        %v485 = vsel %vm447, %v483, %v484
        %v486 = vrot.slane %v336, 1
        %v487 = vsel %vm447, %v484, %v486
        %v488 = vrot.slane %v337, 1
        %v489 = vrot.slane %v338, 1
        %v490 = vsel %vm447, %v488, %v489
        %v491 = vrot.slane %v339, 1
        %v492 = vsel %vm447, %v489, %v491
        %v493 = vrot.slane %v340, 1
        %v494 = vrot.slane %v341, 1
        %v495 = vsel %vm447, %v493, %v494
        %v496 = vrot.slane %v342, 1
        %v497 = vsel %vm447, %v494, %v496
        %v498 = vrot.slane %v343, 1
        %v499 = vrot.slane %v344, 1
        %v500 = vsel %vm447, %v498, %v499
        %v501 = vrot.slane %v345, 1
        %v502 = vsel %vm447, %v499, %v501
        %v503 = vrot.slane %v346, 1
        %v504 = vrot.slane %v347, 1
        %v505 = vsel %vm447, %v503, %v504
        %v506 = vrot.slane %v348, 1
        %v507 = vsel %vm447, %v504, %v506
        %v508 = vrot.slane %v349, 1
        %v509 = vrot.slane %v350, 1
        %v510 = vsel %vm447, %v508, %v509
        %v511 = vrot.slane %v351, 1
        %v512 = vsel %vm447, %v509, %v511
        %v513 = vrot.slane %v352, 1
        %v514 = vrot.slane %v353, 1
        %v515 = vsel %vm447, %v513, %v514
        %v516 = vrot.slane %v354, 1
        %v517 = vsel %vm447, %v514, %v516
        %v518 = vrot.slane %v355, 1
        %v519 = vrot.slane %v356, 1
        %v520 = vsel %vm447, %v518, %v519
        %v521 = vrot.slane %v357, 1
        %v522 = vsel %vm447, %v519, %v521
        %v523 = vrot.slane %v358, 1
        %v524 = vrot.slane %v359, 1
        %v525 = vsel %vm447, %v523, %v524
        %v526 = vrot.slane %v360, 1
        %v527 = vsel %vm447, %v524, %v526
        %528 = vrot.lane.b32.xlu0 %v450, 4
        %v529 = vpop.permute.xlu0 %528
        %530 = vrot.lane.b32.xlu0 %v452, 4
        %v531 = vpop.permute.xlu0 %530
        %532 = vrot.lane.b32.xlu0 %v455, 4
        %v533 = vpop.permute.xlu0 %532
        %534 = vrot.lane.b32.xlu0 %v457, 4
        %v535 = vpop.permute.xlu0 %534
        %536 = vrot.lane.b32.xlu0 %v460, 4
        %v537 = vpop.permute.xlu0 %536
        %538 = vrot.lane.b32.xlu0 %v462, 4
        %v539 = vpop.permute.xlu0 %538
        %540 = vrot.lane.b32.xlu0 %v465, 4
        %v541 = vpop.permute.xlu0 %540
        %542 = vrot.lane.b32.xlu0 %v467, 4
        %v543 = vpop.permute.xlu0 %542
        %544 = vrot.lane.b32.xlu0 %v470, 4
        %v545 = vpop.permute.xlu0 %544
        %546 = vrot.lane.b32.xlu0 %v472, 4
        %v547 = vpop.permute.xlu0 %546
        %548 = vrot.lane.b32.xlu0 %v475, 4
        %v549 = vpop.permute.xlu0 %548
        %550 = vrot.lane.b32.xlu0 %v477, 4
        %v551 = vpop.permute.xlu0 %550
        %552 = vrot.lane.b32.xlu0 %v480, 4
        %v553 = vpop.permute.xlu0 %552
        %554 = vrot.lane.b32.xlu0 %v482, 4
        %v555 = vpop.permute.xlu0 %554
        %556 = vrot.lane.b32.xlu0 %v485, 4
        %v557 = vpop.permute.xlu0 %556
        %558 = vrot.lane.b32.xlu0 %v487, 4
        %v559 = vpop.permute.xlu0 %558
        %560 = vrot.lane.b32.xlu0 %v490, 4
        %v561 = vpop.permute.xlu0 %560
        %562 = vrot.lane.b32.xlu0 %v492, 4
        %v563 = vpop.permute.xlu0 %562
        %564 = vrot.lane.b32.xlu0 %v495, 4
        %v565 = vpop.permute.xlu0 %564
        %566 = vrot.lane.b32.xlu0 %v497, 4
        %v567 = vpop.permute.xlu0 %566
        %568 = vrot.lane.b32.xlu0 %v500, 4
        %v569 = vpop.permute.xlu0 %568
        %570 = vrot.lane.b32.xlu0 %v502, 4
        %v571 = vpop.permute.xlu0 %570
        %572 = vrot.lane.b32.xlu0 %v505, 4
        %v573 = vpop.permute.xlu0 %572
        %574 = vrot.lane.b32.xlu0 %v507, 4
        %v575 = vpop.permute.xlu0 %574
        %576 = vrot.lane.b32.xlu0 %v510, 4
        %v577 = vpop.permute.xlu0 %576
        %578 = vrot.lane.b32.xlu0 %v512, 4
        %v579 = vpop.permute.xlu0 %578
        %580 = vrot.lane.b32.xlu0 %v515, 4
        %v581 = vpop.permute.xlu0 %580
        %582 = vrot.lane.b32.xlu0 %v517, 4
        %v583 = vpop.permute.xlu0 %582
        %584 = vrot.lane.b32.xlu0 %v520, 4
        %v585 = vpop.permute.xlu0 %584
        %586 = vrot.lane.b32.xlu0 %v522, 4
        %v587 = vpop.permute.xlu0 %586
        %588 = vrot.lane.b32.xlu0 %v525, 4
        %v589 = vpop.permute.xlu0 %588
        %590 = vrot.lane.b32.xlu0 %v527, 4
        %v591 = vpop.permute.xlu0 %590
        %vm624 = vcmask 64544
        %625 = vst.msk [vmem:[#allocation3] sm:$0xff] %vm624, %v529
        %626 = vst.msk [vmem:[#allocation3 + $0x8] sm:$0xff] %vm624, %v531
        %627 = vst.msk [vmem:[#allocation3 + $0x10] sm:$0xff] %vm624, %v533
        %628 = vst.msk [vmem:[#allocation3 + $0x18] sm:$0xff] %vm624, %v535
        %629 = vst.msk [vmem:[#allocation3 + $0x20] sm:$0xff] %vm624, %v537
        %630 = vst.msk [vmem:[#allocation3 + $0x28] sm:$0xff] %vm624, %v539
        %631 = vst.msk [vmem:[#allocation3 + $0x30] sm:$0xff] %vm624, %v541
        %632 = vst.msk [vmem:[#allocation3 + $0x38] sm:$0xff] %vm624, %v543
        %633 = vst.msk [vmem:[#allocation3 + $0x40] sm:$0xff] %vm624, %v545
        %634 = vst.msk [vmem:[#allocation3 + $0x48] sm:$0xff] %vm624, %v547
        %635 = vst.msk [vmem:[#allocation3 + $0x50] sm:$0xff] %vm624, %v549
        %636 = vst.msk [vmem:[#allocation3 + $0x58] sm:$0xff] %vm624, %v551
        %637 = vst.msk [vmem:[#allocation3 + $0x60] sm:$0xff] %vm624, %v553
        %638 = vst.msk [vmem:[#allocation3 + $0x68] sm:$0xff] %vm624, %v555
        %639 = vst.msk [vmem:[#allocation3 + $0x70] sm:$0xff] %vm624, %v557
        %640 = vst.msk [vmem:[#allocation3 + $0x78] sm:$0xff] %vm624, %v559
        %641 = vst.msk [vmem:[#allocation3 + $0x80] sm:$0xff] %vm624, %v561
        %642 = vst.msk [vmem:[#allocation3 + $0x88] sm:$0xff] %vm624, %v563
        %643 = vst.msk [vmem:[#allocation3 + $0x90] sm:$0xff] %vm624, %v565
        %644 = vst.msk [vmem:[#allocation3 + $0x98] sm:$0xff] %vm624, %v567
        %645 = vst.msk [vmem:[#allocation3 + $0xa0] sm:$0xff] %vm624, %v569
        %646 = vst.msk [vmem:[#allocation3 + $0xa8] sm:$0xff] %vm624, %v571
        %647 = vst.msk [vmem:[#allocation3 + $0xb0] sm:$0xff] %vm624, %v573
        %648 = vst.msk [vmem:[#allocation3 + $0xb8] sm:$0xff] %vm624, %v575
        %649 = vst.msk [vmem:[#allocation3 + $0xc0] sm:$0xff] %vm624, %v577
        %650 = vst.msk [vmem:[#allocation3 + $0xc8] sm:$0xff] %vm624, %v579
        %651 = vst.msk [vmem:[#allocation3 + $0xd0] sm:$0xff] %vm624, %v581
        %652 = vst.msk [vmem:[#allocation3 + $0xd8] sm:$0xff] %vm624, %v583
        %653 = vst.msk [vmem:[#allocation3 + $0xe0] sm:$0xff] %vm624, %v585
        %654 = vst.msk [vmem:[#allocation3 + $0xe8] sm:$0xff] %vm624, %v587
        %655 = vst.msk [vmem:[#allocation3 + $0xf0] sm:$0xff] %vm624, %v589
        %656 = vst.msk [vmem:[#allocation3 + $0xf8] sm:$0xff] %vm624, %v591
        %vm657 = vcmask 1045504
        %v658 = vrot.slane %v313, 2
        %v659 = vrot.slane %v314, 2
        %v660 = vsel %vm657, %v658, %v659
        %v661 = vrot.slane %v315, 2
        %v662 = vsel %vm657, %v659, %v661
        %v663 = vrot.slane %v316, 2
        %v664 = vrot.slane %v317, 2
        %v665 = vsel %vm657, %v663, %v664
        %v666 = vrot.slane %v318, 2
        %v667 = vsel %vm657, %v664, %v666
        %v668 = vrot.slane %v319, 2
        %v669 = vrot.slane %v320, 2
        %v670 = vsel %vm657, %v668, %v669
        %v671 = vrot.slane %v321, 2
        %v672 = vsel %vm657, %v669, %v671
        %v673 = vrot.slane %v322, 2
        %v674 = vrot.slane %v323, 2
        %v675 = vsel %vm657, %v673, %v674
        %v676 = vrot.slane %v324, 2
        %v677 = vsel %vm657, %v674, %v676
        %v678 = vrot.slane %v325, 2
        %v679 = vrot.slane %v326, 2
        %v680 = vsel %vm657, %v678, %v679
        %v681 = vrot.slane %v327, 2
        %v682 = vsel %vm657, %v679, %v681
        %v683 = vrot.slane %v328, 2
        %v684 = vrot.slane %v329, 2
        %v685 = vsel %vm657, %v683, %v684
        %v686 = vrot.slane %v330, 2
        %v687 = vsel %vm657, %v684, %v686
        %v688 = vrot.slane %v331, 2
        %v689 = vrot.slane %v332, 2
        %v690 = vsel %vm657, %v688, %v689
        %v691 = vrot.slane %v333, 2
        %v692 = vsel %vm657, %v689, %v691
        %v693 = vrot.slane %v334, 2
        %v694 = vrot.slane %v335, 2
        %v695 = vsel %vm657, %v693, %v694
        %v696 = vrot.slane %v336, 2
        %v697 = vsel %vm657, %v694, %v696
        %v698 = vrot.slane %v337, 2
        %v699 = vrot.slane %v338, 2
        %v700 = vsel %vm657, %v698, %v699
        %v701 = vrot.slane %v339, 2
        %v702 = vsel %vm657, %v699, %v701
        %v703 = vrot.slane %v340, 2
        %v704 = vrot.slane %v341, 2
        %v705 = vsel %vm657, %v703, %v704
        %v706 = vrot.slane %v342, 2
        %v707 = vsel %vm657, %v704, %v706
        %v708 = vrot.slane %v343, 2
        %v709 = vrot.slane %v344, 2
        %v710 = vsel %vm657, %v708, %v709
        %v711 = vrot.slane %v345, 2
        %v712 = vsel %vm657, %v709, %v711
        %v713 = vrot.slane %v346, 2
        %v714 = vrot.slane %v347, 2
        %v715 = vsel %vm657, %v713, %v714
        %v716 = vrot.slane %v348, 2
        %v717 = vsel %vm657, %v714, %v716
        %v718 = vrot.slane %v349, 2
        %v719 = vrot.slane %v350, 2
        %v720 = vsel %vm657, %v718, %v719
        %v721 = vrot.slane %v351, 2
        %v722 = vsel %vm657, %v719, %v721
        %v723 = vrot.slane %v352, 2
        %v724 = vrot.slane %v353, 2
        %v725 = vsel %vm657, %v723, %v724
        %v726 = vrot.slane %v354, 2
        %v727 = vsel %vm657, %v724, %v726
        %v728 = vrot.slane %v355, 2
        %v729 = vrot.slane %v356, 2
        %v730 = vsel %vm657, %v728, %v729
        %v731 = vrot.slane %v357, 2
        %v732 = vsel %vm657, %v729, %v731
        %v733 = vrot.slane %v358, 2
        %v734 = vrot.slane %v359, 2
        %v735 = vsel %vm657, %v733, %v734
        %v736 = vrot.slane %v360, 2
        %v737 = vsel %vm657, %v734, %v736
        %738 = vrot.lane.b32.xlu0 %v660, 8
        %v739 = vpop.permute.xlu0 %738
        %740 = vrot.lane.b32.xlu0 %v662, 8
        %v741 = vpop.permute.xlu0 %740
        %742 = vrot.lane.b32.xlu0 %v665, 8
        %v743 = vpop.permute.xlu0 %742
        %744 = vrot.lane.b32.xlu0 %v667, 8
        %v745 = vpop.permute.xlu0 %744
        %746 = vrot.lane.b32.xlu0 %v670, 8
        %v747 = vpop.permute.xlu0 %746
        %748 = vrot.lane.b32.xlu0 %v672, 8
        %v749 = vpop.permute.xlu0 %748
        %750 = vrot.lane.b32.xlu0 %v675, 8
        %v751 = vpop.permute.xlu0 %750
        %752 = vrot.lane.b32.xlu0 %v677, 8
        %v753 = vpop.permute.xlu0 %752
        %754 = vrot.lane.b32.xlu0 %v680, 8
        %v755 = vpop.permute.xlu0 %754
        %756 = vrot.lane.b32.xlu0 %v682, 8
        %v757 = vpop.permute.xlu0 %756
        %758 = vrot.lane.b32.xlu0 %v685, 8
        %v759 = vpop.permute.xlu0 %758
        %760 = vrot.lane.b32.xlu0 %v687, 8
        %v761 = vpop.permute.xlu0 %760
        %762 = vrot.lane.b32.xlu0 %v690, 8
        %v763 = vpop.permute.xlu0 %762
        %764 = vrot.lane.b32.xlu0 %v692, 8
        %v765 = vpop.permute.xlu0 %764
        %766 = vrot.lane.b32.xlu0 %v695, 8
        %v767 = vpop.permute.xlu0 %766
        %768 = vrot.lane.b32.xlu0 %v697, 8
        %v769 = vpop.permute.xlu0 %768
        %770 = vrot.lane.b32.xlu0 %v700, 8
        %v771 = vpop.permute.xlu0 %770
        %772 = vrot.lane.b32.xlu0 %v702, 8
        %v773 = vpop.permute.xlu0 %772
        %774 = vrot.lane.b32.xlu0 %v705, 8
        %v775 = vpop.permute.xlu0 %774
        %776 = vrot.lane.b32.xlu0 %v707, 8
        %v777 = vpop.permute.xlu0 %776
        %778 = vrot.lane.b32.xlu0 %v710, 8
        %v779 = vpop.permute.xlu0 %778
        %780 = vrot.lane.b32.xlu0 %v712, 8
        %v781 = vpop.permute.xlu0 %780
        %782 = vrot.lane.b32.xlu0 %v715, 8
        %v783 = vpop.permute.xlu0 %782
        %784 = vrot.lane.b32.xlu0 %v717, 8
        %v785 = vpop.permute.xlu0 %784
        %786 = vrot.lane.b32.xlu0 %v720, 8
        %v787 = vpop.permute.xlu0 %786
        %788 = vrot.lane.b32.xlu0 %v722, 8
        %v789 = vpop.permute.xlu0 %788
        %790 = vrot.lane.b32.xlu0 %v725, 8
        %v791 = vpop.permute.xlu0 %790
        %792 = vrot.lane.b32.xlu0 %v727, 8
        %v793 = vpop.permute.xlu0 %792
        %794 = vrot.lane.b32.xlu0 %v730, 8
        %v795 = vpop.permute.xlu0 %794
        %796 = vrot.lane.b32.xlu0 %v732, 8
        %v797 = vpop.permute.xlu0 %796
        %798 = vrot.lane.b32.xlu0 %v735, 8
        %v799 = vpop.permute.xlu0 %798
        %800 = vrot.lane.b32.xlu0 %v737, 8
        %v801 = vpop.permute.xlu0 %800
        %vm834 = vcmask 97344
        %835 = vst.msk [vmem:[#allocation3] sm:$0xff] %vm834, %v739
        %836 = vst.msk [vmem:[#allocation3 + $0x8] sm:$0xff] %vm834, %v741
        %837 = vst.msk [vmem:[#allocation3 + $0x10] sm:$0xff] %vm834, %v743
        %838 = vst.msk [vmem:[#allocation3 + $0x18] sm:$0xff] %vm834, %v745
        %839 = vst.msk [vmem:[#allocation3 + $0x20] sm:$0xff] %vm834, %v747
        %840 = vst.msk [vmem:[#allocation3 + $0x28] sm:$0xff] %vm834, %v749
        %841 = vst.msk [vmem:[#allocation3 + $0x30] sm:$0xff] %vm834, %v751
        %842 = vst.msk [vmem:[#allocation3 + $0x38] sm:$0xff] %vm834, %v753
        %843 = vst.msk [vmem:[#allocation3 + $0x40] sm:$0xff] %vm834, %v755
        %844 = vst.msk [vmem:[#allocation3 + $0x48] sm:$0xff] %vm834, %v757
        %845 = vst.msk [vmem:[#allocation3 + $0x50] sm:$0xff] %vm834, %v759
        %846 = vst.msk [vmem:[#allocation3 + $0x58] sm:$0xff] %vm834, %v761
        %847 = vst.msk [vmem:[#allocation3 + $0x60] sm:$0xff] %vm834, %v763
        %848 = vst.msk [vmem:[#allocation3 + $0x68] sm:$0xff] %vm834, %v765
        %849 = vst.msk [vmem:[#allocation3 + $0x70] sm:$0xff] %vm834, %v767
        %850 = vst.msk [vmem:[#allocation3 + $0x78] sm:$0xff] %vm834, %v769
        %851 = vst.msk [vmem:[#allocation3 + $0x80] sm:$0xff] %vm834, %v771
        %852 = vst.msk [vmem:[#allocation3 + $0x88] sm:$0xff] %vm834, %v773
        %853 = vst.msk [vmem:[#allocation3 + $0x90] sm:$0xff] %vm834, %v775
        %854 = vst.msk [vmem:[#allocation3 + $0x98] sm:$0xff] %vm834, %v777
        %855 = vst.msk [vmem:[#allocation3 + $0xa0] sm:$0xff] %vm834, %v779
        %856 = vst.msk [vmem:[#allocation3 + $0xa8] sm:$0xff] %vm834, %v781
        %857 = vst.msk [vmem:[#allocation3 + $0xb0] sm:$0xff] %vm834, %v783
        %858 = vst.msk [vmem:[#allocation3 + $0xb8] sm:$0xff] %vm834, %v785
        %859 = vst.msk [vmem:[#allocation3 + $0xc0] sm:$0xff] %vm834, %v787
        %860 = vst.msk [vmem:[#allocation3 + $0xc8] sm:$0xff] %vm834, %v789
        %861 = vst.msk [vmem:[#allocation3 + $0xd0] sm:$0xff] %vm834, %v791
        %862 = vst.msk [vmem:[#allocation3 + $0xd8] sm:$0xff] %vm834, %v793
        %863 = vst.msk [vmem:[#allocation3 + $0xe0] sm:$0xff] %vm834, %v795
        %864 = vst.msk [vmem:[#allocation3 + $0xe8] sm:$0xff] %vm834, %v797
        %865 = vst.msk [vmem:[#allocation3 + $0xf0] sm:$0xff] %vm834, %v799
        %866 = vst.msk [vmem:[#allocation3 + $0xf8] sm:$0xff] %vm834, %v801
        %869 = vrot.lane.b32.xlu0 %v316, 12
        %v870 = vpop.permute.xlu0 %869
        %871 = vrot.lane.b32.xlu0 %v317, 12
        %v872 = vpop.permute.xlu0 %871
        %873 = vrot.lane.b32.xlu0 %v319, 12
        %v874 = vpop.permute.xlu0 %873
        %875 = vrot.lane.b32.xlu0 %v320, 12
        %v876 = vpop.permute.xlu0 %875
        %877 = vrot.lane.b32.xlu0 %v322, 12
        %v878 = vpop.permute.xlu0 %877
        %879 = vrot.lane.b32.xlu0 %v323, 12
        %v880 = vpop.permute.xlu0 %879
        %881 = vrot.lane.b32.xlu0 %v325, 12
        %v882 = vpop.permute.xlu0 %881
        %883 = vrot.lane.b32.xlu0 %v326, 12
        %v884 = vpop.permute.xlu0 %883
        %885 = vrot.lane.b32.xlu0 %v328, 12
        %v886 = vpop.permute.xlu0 %885
        %887 = vrot.lane.b32.xlu0 %v329, 12
        %v888 = vpop.permute.xlu0 %887
        %889 = vrot.lane.b32.xlu0 %v331, 12
        %v890 = vpop.permute.xlu0 %889
        %891 = vrot.lane.b32.xlu0 %v332, 12
        %v892 = vpop.permute.xlu0 %891
        %893 = vrot.lane.b32.xlu0 %v334, 12
        %v894 = vpop.permute.xlu0 %893
        %895 = vrot.lane.b32.xlu0 %v335, 12
        %v896 = vpop.permute.xlu0 %895
        %897 = vrot.lane.b32.xlu0 %v337, 12
        %v898 = vpop.permute.xlu0 %897
        %899 = vrot.lane.b32.xlu0 %v338, 12
        %v900 = vpop.permute.xlu0 %899
        %901 = vrot.lane.b32.xlu0 %v340, 12
        %v902 = vpop.permute.xlu0 %901
        %903 = vrot.lane.b32.xlu0 %v341, 12
        %v904 = vpop.permute.xlu0 %903
        %905 = vrot.lane.b32.xlu0 %v343, 12
        %v906 = vpop.permute.xlu0 %905
        %907 = vrot.lane.b32.xlu0 %v344, 12
        %v908 = vpop.permute.xlu0 %907
        %909 = vrot.lane.b32.xlu0 %v346, 12
        %v910 = vpop.permute.xlu0 %909
        %911 = vrot.lane.b32.xlu0 %v347, 12
        %v912 = vpop.permute.xlu0 %911
        %913 = vrot.lane.b32.xlu0 %v349, 12
        %v914 = vpop.permute.xlu0 %913
        %915 = vrot.lane.b32.xlu0 %v350, 12
        %v916 = vpop.permute.xlu0 %915
        %917 = vrot.lane.b32.xlu0 %v352, 12
        %v918 = vpop.permute.xlu0 %917
        %919 = vrot.lane.b32.xlu0 %v353, 12
        %v920 = vpop.permute.xlu0 %919
        %921 = vrot.lane.b32.xlu0 %v355, 12
        %v922 = vpop.permute.xlu0 %921
        %923 = vrot.lane.b32.xlu0 %v356, 12
        %v924 = vpop.permute.xlu0 %923
        %925 = vrot.lane.b32.xlu0 %v358, 12
        %v926 = vpop.permute.xlu0 %925
        %927 = vrot.lane.b32.xlu0 %v359, 12
        %v928 = vpop.permute.xlu0 %927
        %929 = vrot.lane.b32.xlu0 %v361, 12
        %v930 = vpop.permute.xlu0 %929
        %931 = vrot.lane.b32.xlu0 %v362, 12
        %v932 = vpop.permute.xlu0 %931
        %vm965 = vcmask 130144
        %966 = vst.msk [vmem:[#allocation3] sm:$0xff] %vm965, %v870
        %967 = vst.msk [vmem:[#allocation3 + $0x8] sm:$0xff] %vm965, %v872
        %968 = vst.msk [vmem:[#allocation3 + $0x10] sm:$0xff] %vm965, %v874
        %969 = vst.msk [vmem:[#allocation3 + $0x18] sm:$0xff] %vm965, %v876
        %970 = vst.msk [vmem:[#allocation3 + $0x20] sm:$0xff] %vm965, %v878
        %971 = vst.msk [vmem:[#allocation3 + $0x28] sm:$0xff] %vm965, %v880
        %972 = vst.msk [vmem:[#allocation3 + $0x30] sm:$0xff] %vm965, %v882
        %973 = vst.msk [vmem:[#allocation3 + $0x38] sm:$0xff] %vm965, %v884
        %974 = vst.msk [vmem:[#allocation3 + $0x40] sm:$0xff] %vm965, %v886
        %975 = vst.msk [vmem:[#allocation3 + $0x48] sm:$0xff] %vm965, %v888
        %976 = vst.msk [vmem:[#allocation3 + $0x50] sm:$0xff] %vm965, %v890
        %977 = vst.msk [vmem:[#allocation3 + $0x58] sm:$0xff] %vm965, %v892
        %978 = vst.msk [vmem:[#allocation3 + $0x60] sm:$0xff] %vm965, %v894
        %979 = vst.msk [vmem:[#allocation3 + $0x68] sm:$0xff] %vm965, %v896
        %980 = vst.msk [vmem:[#allocation3 + $0x70] sm:$0xff] %vm965, %v898
        %981 = vst.msk [vmem:[#allocation3 + $0x78] sm:$0xff] %vm965, %v900
        %982 = vst.msk [vmem:[#allocation3 + $0x80] sm:$0xff] %vm965, %v902
        %983 = vst.msk [vmem:[#allocation3 + $0x88] sm:$0xff] %vm965, %v904
        %984 = vst.msk [vmem:[#allocation3 + $0x90] sm:$0xff] %vm965, %v906
        %985 = vst.msk [vmem:[#allocation3 + $0x98] sm:$0xff] %vm965, %v908
        %986 = vst.msk [vmem:[#allocation3 + $0xa0] sm:$0xff] %vm965, %v910
        %987 = vst.msk [vmem:[#allocation3 + $0xa8] sm:$0xff] %vm965, %v912
        %988 = vst.msk [vmem:[#allocation3 + $0xb0] sm:$0xff] %vm965, %v914
        %989 = vst.msk [vmem:[#allocation3 + $0xb8] sm:$0xff] %vm965, %v916
        %990 = vst.msk [vmem:[#allocation3 + $0xc0] sm:$0xff] %vm965, %v918
        %991 = vst.msk [vmem:[#allocation3 + $0xc8] sm:$0xff] %vm965, %v920
        %992 = vst.msk [vmem:[#allocation3 + $0xd0] sm:$0xff] %vm965, %v922
        %993 = vst.msk [vmem:[#allocation3 + $0xd8] sm:$0xff] %vm965, %v924
        %994 = vst.msk [vmem:[#allocation3 + $0xe0] sm:$0xff] %vm965, %v926
        %995 = vst.msk [vmem:[#allocation3 + $0xe8] sm:$0xff] %vm965, %v928
        %996 = vst.msk [vmem:[#allocation3 + $0xf0] sm:$0xff] %vm965, %v930
        %997 = vst.msk [vmem:[#allocation3 + $0xf8] sm:$0xff] %vm965, %v932
        %v999 = vrot.slane %v361, 1
        %v1000 = vrot.slane %v362, 1
        %v1001 = vsel %vm447, %v999, %v1000
        %v1002 = vrot.slane %v363, 1
        %v1003 = vsel %vm447, %v1000, %v1002
        %1004 = vrot.lane.b32.xlu0 %v455, 16
        %v1005 = vpop.permute.xlu0 %1004
        %1006 = vrot.lane.b32.xlu0 %v457, 16
        %v1007 = vpop.permute.xlu0 %1006
        %1008 = vrot.lane.b32.xlu0 %v460, 16
        %v1009 = vpop.permute.xlu0 %1008
        %1010 = vrot.lane.b32.xlu0 %v462, 16
        %v1011 = vpop.permute.xlu0 %1010
        %1012 = vrot.lane.b32.xlu0 %v465, 16
        %v1013 = vpop.permute.xlu0 %1012
        %1014 = vrot.lane.b32.xlu0 %v467, 16
        %v1015 = vpop.permute.xlu0 %1014
        %1016 = vrot.lane.b32.xlu0 %v470, 16
        %v1017 = vpop.permute.xlu0 %1016
        %1018 = vrot.lane.b32.xlu0 %v472, 16
        %v1019 = vpop.permute.xlu0 %1018
        %1020 = vrot.lane.b32.xlu0 %v475, 16
        %v1021 = vpop.permute.xlu0 %1020
        %1022 = vrot.lane.b32.xlu0 %v477, 16
        %v1023 = vpop.permute.xlu0 %1022
        %1024 = vrot.lane.b32.xlu0 %v480, 16
        %v1025 = vpop.permute.xlu0 %1024
        %1026 = vrot.lane.b32.xlu0 %v482, 16
        %v1027 = vpop.permute.xlu0 %1026
        %1028 = vrot.lane.b32.xlu0 %v485, 16
        %v1029 = vpop.permute.xlu0 %1028
        %1030 = vrot.lane.b32.xlu0 %v487, 16
        %v1031 = vpop.permute.xlu0 %1030
        %1032 = vrot.lane.b32.xlu0 %v490, 16
        %v1033 = vpop.permute.xlu0 %1032
        %1034 = vrot.lane.b32.xlu0 %v492, 16
        %v1035 = vpop.permute.xlu0 %1034
        %1036 = vrot.lane.b32.xlu0 %v495, 16
        %v1037 = vpop.permute.xlu0 %1036
        %1038 = vrot.lane.b32.xlu0 %v497, 16
        %v1039 = vpop.permute.xlu0 %1038
        %1040 = vrot.lane.b32.xlu0 %v500, 16
        %v1041 = vpop.permute.xlu0 %1040
        %1042 = vrot.lane.b32.xlu0 %v502, 16
        %v1043 = vpop.permute.xlu0 %1042
        %1044 = vrot.lane.b32.xlu0 %v505, 16
        %v1045 = vpop.permute.xlu0 %1044
        %1046 = vrot.lane.b32.xlu0 %v507, 16
        %v1047 = vpop.permute.xlu0 %1046
        %1048 = vrot.lane.b32.xlu0 %v510, 16
        %v1049 = vpop.permute.xlu0 %1048
        %1050 = vrot.lane.b32.xlu0 %v512, 16
        %v1051 = vpop.permute.xlu0 %1050
        %1052 = vrot.lane.b32.xlu0 %v515, 16
        %v1053 = vpop.permute.xlu0 %1052
        %1054 = vrot.lane.b32.xlu0 %v517, 16
        %v1055 = vpop.permute.xlu0 %1054
        %1056 = vrot.lane.b32.xlu0 %v520, 16
        %v1057 = vpop.permute.xlu0 %1056
        %1058 = vrot.lane.b32.xlu0 %v522, 16
        %v1059 = vpop.permute.xlu0 %1058
        %1060 = vrot.lane.b32.xlu0 %v525, 16
        %v1061 = vpop.permute.xlu0 %1060
        %1062 = vrot.lane.b32.xlu0 %v527, 16
        %v1063 = vpop.permute.xlu0 %1062
        %1064 = vrot.lane.b32.xlu0 %v1001, 16
        %v1065 = vpop.permute.xlu0 %1064
        %1066 = vrot.lane.b32.xlu0 %v1003, 16
        %v1067 = vpop.permute.xlu0 %1066
        %vm1100 = vcmask 162944
        %1101 = vst.msk [vmem:[#allocation3] sm:$0xff] %vm1100, %v1005
        %1102 = vst.msk [vmem:[#allocation3 + $0x8] sm:$0xff] %vm1100, %v1007
        %1103 = vst.msk [vmem:[#allocation3 + $0x10] sm:$0xff] %vm1100, %v1009
        %1104 = vst.msk [vmem:[#allocation3 + $0x18] sm:$0xff] %vm1100, %v1011
        %1105 = vst.msk [vmem:[#allocation3 + $0x20] sm:$0xff] %vm1100, %v1013
        %1106 = vst.msk [vmem:[#allocation3 + $0x28] sm:$0xff] %vm1100, %v1015
        %1107 = vst.msk [vmem:[#allocation3 + $0x30] sm:$0xff] %vm1100, %v1017
        %1108 = vst.msk [vmem:[#allocation3 + $0x38] sm:$0xff] %vm1100, %v1019
        %1109 = vst.msk [vmem:[#allocation3 + $0x40] sm:$0xff] %vm1100, %v1021
        %1110 = vst.msk [vmem:[#allocation3 + $0x48] sm:$0xff] %vm1100, %v1023
        %1111 = vst.msk [vmem:[#allocation3 + $0x50] sm:$0xff] %vm1100, %v1025
        %1112 = vst.msk [vmem:[#allocation3 + $0x58] sm:$0xff] %vm1100, %v1027
        %1113 = vst.msk [vmem:[#allocation3 + $0x60] sm:$0xff] %vm1100, %v1029
        %1114 = vst.msk [vmem:[#allocation3 + $0x68] sm:$0xff] %vm1100, %v1031
        %1115 = vst.msk [vmem:[#allocation3 + $0x70] sm:$0xff] %vm1100, %v1033
        %1116 = vst.msk [vmem:[#allocation3 + $0x78] sm:$0xff] %vm1100, %v1035
        %1117 = vst.msk [vmem:[#allocation3 + $0x80] sm:$0xff] %vm1100, %v1037
        %1118 = vst.msk [vmem:[#allocation3 + $0x88] sm:$0xff] %vm1100, %v1039
        %1119 = vst.msk [vmem:[#allocation3 + $0x90] sm:$0xff] %vm1100, %v1041
        %1120 = vst.msk [vmem:[#allocation3 + $0x98] sm:$0xff] %vm1100, %v1043
        %1121 = vst.msk [vmem:[#allocation3 + $0xa0] sm:$0xff] %vm1100, %v1045
        %1122 = vst.msk [vmem:[#allocation3 + $0xa8] sm:$0xff] %vm1100, %v1047
        %1123 = vst.msk [vmem:[#allocation3 + $0xb0] sm:$0xff] %vm1100, %v1049
        %1124 = vst.msk [vmem:[#allocation3 + $0xb8] sm:$0xff] %vm1100, %v1051
        %1125 = vst.msk [vmem:[#allocation3 + $0xc0] sm:$0xff] %vm1100, %v1053
        %1126 = vst.msk [vmem:[#allocation3 + $0xc8] sm:$0xff] %vm1100, %v1055
        %1127 = vst.msk [vmem:[#allocation3 + $0xd0] sm:$0xff] %vm1100, %v1057
        %1128 = vst.msk [vmem:[#allocation3 + $0xd8] sm:$0xff] %vm1100, %v1059
        %1129 = vst.msk [vmem:[#allocation3 + $0xe0] sm:$0xff] %vm1100, %v1061
        %1130 = vst.msk [vmem:[#allocation3 + $0xe8] sm:$0xff] %vm1100, %v1063
        %1131 = vst.msk [vmem:[#allocation3 + $0xf0] sm:$0xff] %vm1100, %v1065
        %1132 = vst.msk [vmem:[#allocation3 + $0xf8] sm:$0xff] %vm1100, %v1067
        %v1133 = vrot.slane %v361, 2
        %v1134 = vrot.slane %v362, 2
        %v1135 = vsel %vm657, %v1133, %v1134
        %v1136 = vrot.slane %v363, 2
        %v1137 = vsel %vm657, %v1134, %v1136
        %1138 = vrot.lane.b32.xlu0 %v665, 20
        %v1139 = vpop.permute.xlu0 %1138
        %1140 = vrot.lane.b32.xlu0 %v667, 20
        %v1141 = vpop.permute.xlu0 %1140
        %1142 = vrot.lane.b32.xlu0 %v670, 20
        %v1143 = vpop.permute.xlu0 %1142
        %1144 = vrot.lane.b32.xlu0 %v672, 20
        %v1145 = vpop.permute.xlu0 %1144
        %1146 = vrot.lane.b32.xlu0 %v675, 20
        %v1147 = vpop.permute.xlu0 %1146
        %1148 = vrot.lane.b32.xlu0 %v677, 20
        %v1149 = vpop.permute.xlu0 %1148
        %1150 = vrot.lane.b32.xlu0 %v680, 20
        %v1151 = vpop.permute.xlu0 %1150
        %1152 = vrot.lane.b32.xlu0 %v682, 20
        %v1153 = vpop.permute.xlu0 %1152
        %1154 = vrot.lane.b32.xlu0 %v685, 20
        %v1155 = vpop.permute.xlu0 %1154
        %1156 = vrot.lane.b32.xlu0 %v687, 20
        %v1157 = vpop.permute.xlu0 %1156
        %1158 = vrot.lane.b32.xlu0 %v690, 20
        %v1159 = vpop.permute.xlu0 %1158
        %1160 = vrot.lane.b32.xlu0 %v692, 20
        %v1161 = vpop.permute.xlu0 %1160
        %1162 = vrot.lane.b32.xlu0 %v695, 20
        %v1163 = vpop.permute.xlu0 %1162
        %1164 = vrot.lane.b32.xlu0 %v697, 20
        %v1165 = vpop.permute.xlu0 %1164
        %1166 = vrot.lane.b32.xlu0 %v700, 20
        %v1167 = vpop.permute.xlu0 %1166
        %1168 = vrot.lane.b32.xlu0 %v702, 20
        %v1169 = vpop.permute.xlu0 %1168
        %1170 = vrot.lane.b32.xlu0 %v705, 20
        %v1171 = vpop.permute.xlu0 %1170
        %1172 = vrot.lane.b32.xlu0 %v707, 20
        %v1173 = vpop.permute.xlu0 %1172
        %1174 = vrot.lane.b32.xlu0 %v710, 20
        %v1175 = vpop.permute.xlu0 %1174
        %1176 = vrot.lane.b32.xlu0 %v712, 20
        %v1177 = vpop.permute.xlu0 %1176
        %1178 = vrot.lane.b32.xlu0 %v715, 20
        %v1179 = vpop.permute.xlu0 %1178
        %1180 = vrot.lane.b32.xlu0 %v717, 20
        %v1181 = vpop.permute.xlu0 %1180
        %1182 = vrot.lane.b32.xlu0 %v720, 20
        %v1183 = vpop.permute.xlu0 %1182
        %1184 = vrot.lane.b32.xlu0 %v722, 20
        %v1185 = vpop.permute.xlu0 %1184
        %1186 = vrot.lane.b32.xlu0 %v725, 20
        %v1187 = vpop.permute.xlu0 %1186
        %1188 = vrot.lane.b32.xlu0 %v727, 20
        %v1189 = vpop.permute.xlu0 %1188
        %1190 = vrot.lane.b32.xlu0 %v730, 20
        %v1191 = vpop.permute.xlu0 %1190
        %1192 = vrot.lane.b32.xlu0 %v732, 20
        %v1193 = vpop.permute.xlu0 %1192
        %1194 = vrot.lane.b32.xlu0 %v735, 20
        %v1195 = vpop.permute.xlu0 %1194
        %1196 = vrot.lane.b32.xlu0 %v737, 20
        %v1197 = vpop.permute.xlu0 %1196
        %1198 = vrot.lane.b32.xlu0 %v1135, 20
        %v1199 = vpop.permute.xlu0 %1198
        %1200 = vrot.lane.b32.xlu0 %v1137, 20
        %v1201 = vpop.permute.xlu0 %1200
        %vm1234 = vcmask 195744
        %1235 = vst.msk [vmem:[#allocation3] sm:$0xff] %vm1234, %v1139
        %1236 = vst.msk [vmem:[#allocation3 + $0x8] sm:$0xff] %vm1234, %v1141
        %1237 = vst.msk [vmem:[#allocation3 + $0x10] sm:$0xff] %vm1234, %v1143
        %1238 = vst.msk [vmem:[#allocation3 + $0x18] sm:$0xff] %vm1234, %v1145
        %1239 = vst.msk [vmem:[#allocation3 + $0x20] sm:$0xff] %vm1234, %v1147
        %1240 = vst.msk [vmem:[#allocation3 + $0x28] sm:$0xff] %vm1234, %v1149
        %1241 = vst.msk [vmem:[#allocation3 + $0x30] sm:$0xff] %vm1234, %v1151
        %1242 = vst.msk [vmem:[#allocation3 + $0x38] sm:$0xff] %vm1234, %v1153
        %1243 = vst.msk [vmem:[#allocation3 + $0x40] sm:$0xff] %vm1234, %v1155
        %1244 = vst.msk [vmem:[#allocation3 + $0x48] sm:$0xff] %vm1234, %v1157
        %1245 = vst.msk [vmem:[#allocation3 + $0x50] sm:$0xff] %vm1234, %v1159
        %1246 = vst.msk [vmem:[#allocation3 + $0x58] sm:$0xff] %vm1234, %v1161
        %1247 = vst.msk [vmem:[#allocation3 + $0x60] sm:$0xff] %vm1234, %v1163
        %1248 = vst.msk [vmem:[#allocation3 + $0x68] sm:$0xff] %vm1234, %v1165
        %1249 = vst.msk [vmem:[#allocation3 + $0x70] sm:$0xff] %vm1234, %v1167
        %1250 = vst.msk [vmem:[#allocation3 + $0x78] sm:$0xff] %vm1234, %v1169
        %1251 = vst.msk [vmem:[#allocation3 + $0x80] sm:$0xff] %vm1234, %v1171
        %1252 = vst.msk [vmem:[#allocation3 + $0x88] sm:$0xff] %vm1234, %v1173
        %1253 = vst.msk [vmem:[#allocation3 + $0x90] sm:$0xff] %vm1234, %v1175
        %1254 = vst.msk [vmem:[#allocation3 + $0x98] sm:$0xff] %vm1234, %v1177
        %1255 = vst.msk [vmem:[#allocation3 + $0xa0] sm:$0xff] %vm1234, %v1179
        %1256 = vst.msk [vmem:[#allocation3 + $0xa8] sm:$0xff] %vm1234, %v1181
        %1257 = vst.msk [vmem:[#allocation3 + $0xb0] sm:$0xff] %vm1234, %v1183
        %1258 = vst.msk [vmem:[#allocation3 + $0xb8] sm:$0xff] %vm1234, %v1185
        %1259 = vst.msk [vmem:[#allocation3 + $0xc0] sm:$0xff] %vm1234, %v1187
        %1260 = vst.msk [vmem:[#allocation3 + $0xc8] sm:$0xff] %vm1234, %v1189
        %1261 = vst.msk [vmem:[#allocation3 + $0xd0] sm:$0xff] %vm1234, %v1191
        %1262 = vst.msk [vmem:[#allocation3 + $0xd8] sm:$0xff] %vm1234, %v1193
        %1263 = vst.msk [vmem:[#allocation3 + $0xe0] sm:$0xff] %vm1234, %v1195
        %1264 = vst.msk [vmem:[#allocation3 + $0xe8] sm:$0xff] %vm1234, %v1197
        %1265 = vst.msk [vmem:[#allocation3 + $0xf0] sm:$0xff] %vm1234, %v1199
        %1266 = vst.msk [vmem:[#allocation3 + $0xf8] sm:$0xff] %vm1234, %v1201
        %1269 = vrot.lane.b32.xlu0 %v319, 24
        %v1270 = vpop.permute.xlu0 %1269
        %1271 = vrot.lane.b32.xlu0 %v320, 24
        %v1272 = vpop.permute.xlu0 %1271
        %1273 = vrot.lane.b32.xlu0 %v322, 24
        %v1274 = vpop.permute.xlu0 %1273
        %1275 = vrot.lane.b32.xlu0 %v323, 24
        %v1276 = vpop.permute.xlu0 %1275
        %1277 = vrot.lane.b32.xlu0 %v325, 24
        %v1278 = vpop.permute.xlu0 %1277
        %1279 = vrot.lane.b32.xlu0 %v326, 24
        %v1280 = vpop.permute.xlu0 %1279
        %1281 = vrot.lane.b32.xlu0 %v328, 24
        %v1282 = vpop.permute.xlu0 %1281
        %1283 = vrot.lane.b32.xlu0 %v329, 24
        %v1284 = vpop.permute.xlu0 %1283
        %1285 = vrot.lane.b32.xlu0 %v331, 24
        %v1286 = vpop.permute.xlu0 %1285
        %1287 = vrot.lane.b32.xlu0 %v332, 24
        %v1288 = vpop.permute.xlu0 %1287
        %1289 = vrot.lane.b32.xlu0 %v334, 24
        %v1290 = vpop.permute.xlu0 %1289
        %1291 = vrot.lane.b32.xlu0 %v335, 24
        %v1292 = vpop.permute.xlu0 %1291
        %1293 = vrot.lane.b32.xlu0 %v337, 24
        %v1294 = vpop.permute.xlu0 %1293
        %1295 = vrot.lane.b32.xlu0 %v338, 24
        %v1296 = vpop.permute.xlu0 %1295
        %1297 = vrot.lane.b32.xlu0 %v340, 24
        %v1298 = vpop.permute.xlu0 %1297
        %1299 = vrot.lane.b32.xlu0 %v341, 24
        %v1300 = vpop.permute.xlu0 %1299
        %1301 = vrot.lane.b32.xlu0 %v343, 24
        %v1302 = vpop.permute.xlu0 %1301
        %1303 = vrot.lane.b32.xlu0 %v344, 24
        %v1304 = vpop.permute.xlu0 %1303
        %1305 = vrot.lane.b32.xlu0 %v346, 24
        %v1306 = vpop.permute.xlu0 %1305
        %1307 = vrot.lane.b32.xlu0 %v347, 24
        %v1308 = vpop.permute.xlu0 %1307
        %1309 = vrot.lane.b32.xlu0 %v349, 24
        %v1310 = vpop.permute.xlu0 %1309
        %1311 = vrot.lane.b32.xlu0 %v350, 24
        %v1312 = vpop.permute.xlu0 %1311
        %1313 = vrot.lane.b32.xlu0 %v352, 24
        %v1314 = vpop.permute.xlu0 %1313
        %1315 = vrot.lane.b32.xlu0 %v353, 24
        %v1316 = vpop.permute.xlu0 %1315
        %1317 = vrot.lane.b32.xlu0 %v355, 24
        %v1318 = vpop.permute.xlu0 %1317
        %1319 = vrot.lane.b32.xlu0 %v356, 24
        %v1320 = vpop.permute.xlu0 %1319
        %1321 = vrot.lane.b32.xlu0 %v358, 24
        %v1322 = vpop.permute.xlu0 %1321
        %1323 = vrot.lane.b32.xlu0 %v359, 24
        %v1324 = vpop.permute.xlu0 %1323
        %1325 = vrot.lane.b32.xlu0 %v361, 24
        %v1326 = vpop.permute.xlu0 %1325
        %1327 = vrot.lane.b32.xlu0 %v362, 24
        %v1328 = vpop.permute.xlu0 %1327
        %1329 = vrot.lane.b32.xlu0 %v364, 24
        %v1330 = vpop.permute.xlu0 %1329
        %1331 = vrot.lane.b32.xlu0 %v365, 24
        %v1332 = vpop.permute.xlu0 %1331
        %vm1365 = vcmask 228544
        %1366 = vst.msk [vmem:[#allocation3] sm:$0xff] %vm1365, %v1270
        %1367 = vst.msk [vmem:[#allocation3 + $0x8] sm:$0xff] %vm1365, %v1272
        %1368 = vst.msk [vmem:[#allocation3 + $0x10] sm:$0xff] %vm1365, %v1274
        %1369 = vst.msk [vmem:[#allocation3 + $0x18] sm:$0xff] %vm1365, %v1276
        %1370 = vst.msk [vmem:[#allocation3 + $0x20] sm:$0xff] %vm1365, %v1278
        %1371 = vst.msk [vmem:[#allocation3 + $0x28] sm:$0xff] %vm1365, %v1280
        %1372 = vst.msk [vmem:[#allocation3 + $0x30] sm:$0xff] %vm1365, %v1282
        %1373 = vst.msk [vmem:[#allocation3 + $0x38] sm:$0xff] %vm1365, %v1284
        %1374 = vst.msk [vmem:[#allocation3 + $0x40] sm:$0xff] %vm1365, %v1286
        %1375 = vst.msk [vmem:[#allocation3 + $0x48] sm:$0xff] %vm1365, %v1288
        %1376 = vst.msk [vmem:[#allocation3 + $0x50] sm:$0xff] %vm1365, %v1290
        %1377 = vst.msk [vmem:[#allocation3 + $0x58] sm:$0xff] %vm1365, %v1292
        %1378 = vst.msk [vmem:[#allocation3 + $0x60] sm:$0xff] %vm1365, %v1294
        %1379 = vst.msk [vmem:[#allocation3 + $0x68] sm:$0xff] %vm1365, %v1296
        %1380 = vst.msk [vmem:[#allocation3 + $0x70] sm:$0xff] %vm1365, %v1298
        %1381 = vst.msk [vmem:[#allocation3 + $0x78] sm:$0xff] %vm1365, %v1300
        %1382 = vst.msk [vmem:[#allocation3 + $0x80] sm:$0xff] %vm1365, %v1302
        %1383 = vst.msk [vmem:[#allocation3 + $0x88] sm:$0xff] %vm1365, %v1304
        %1384 = vst.msk [vmem:[#allocation3 + $0x90] sm:$0xff] %vm1365, %v1306
        %1385 = vst.msk [vmem:[#allocation3 + $0x98] sm:$0xff] %vm1365, %v1308
        %1386 = vst.msk [vmem:[#allocation3 + $0xa0] sm:$0xff] %vm1365, %v1310
        %1387 = vst.msk [vmem:[#allocation3 + $0xa8] sm:$0xff] %vm1365, %v1312
        %1388 = vst.msk [vmem:[#allocation3 + $0xb0] sm:$0xff] %vm1365, %v1314
        %1389 = vst.msk [vmem:[#allocation3 + $0xb8] sm:$0xff] %vm1365, %v1316
        %1390 = vst.msk [vmem:[#allocation3 + $0xc0] sm:$0xff] %vm1365, %v1318
        %1391 = vst.msk [vmem:[#allocation3 + $0xc8] sm:$0xff] %vm1365, %v1320
        %1392 = vst.msk [vmem:[#allocation3 + $0xd0] sm:$0xff] %vm1365, %v1322
        %1393 = vst.msk [vmem:[#allocation3 + $0xd8] sm:$0xff] %vm1365, %v1324
        %1394 = vst.msk [vmem:[#allocation3 + $0xe0] sm:$0xff] %vm1365, %v1326
        %1395 = vst.msk [vmem:[#allocation3 + $0xe8] sm:$0xff] %vm1365, %v1328
        %1396 = vst.msk [vmem:[#allocation3 + $0xf0] sm:$0xff] %vm1365, %v1330
        %1397 = vst.msk [vmem:[#allocation3 + $0xf8] sm:$0xff] %vm1365, %v1332
        %v1399 = vrot.slane %v364, 1
        %v1400 = vrot.slane %v365, 1
        %v1401 = vsel %vm447, %v1399, %v1400
        %v1402 = vrot.slane %v366, 1
        %v1403 = vsel %vm447, %v1400, %v1402
        %1404 = vrot.lane.b32.xlu0 %v460, 28
        %v1405 = vpop.permute.xlu0 %1404
        %1406 = vrot.lane.b32.xlu0 %v462, 28
        %v1407 = vpop.permute.xlu0 %1406
        %1408 = vrot.lane.b32.xlu0 %v465, 28
        %v1409 = vpop.permute.xlu0 %1408
        %1410 = vrot.lane.b32.xlu0 %v467, 28
        %v1411 = vpop.permute.xlu0 %1410
        %1412 = vrot.lane.b32.xlu0 %v470, 28
        %v1413 = vpop.permute.xlu0 %1412
        %1414 = vrot.lane.b32.xlu0 %v472, 28
        %v1415 = vpop.permute.xlu0 %1414
        %1416 = vrot.lane.b32.xlu0 %v475, 28
        %v1417 = vpop.permute.xlu0 %1416
        %1418 = vrot.lane.b32.xlu0 %v477, 28
        %v1419 = vpop.permute.xlu0 %1418
        %1420 = vrot.lane.b32.xlu0 %v480, 28
        %v1421 = vpop.permute.xlu0 %1420
        %1422 = vrot.lane.b32.xlu0 %v482, 28
        %v1423 = vpop.permute.xlu0 %1422
        %1424 = vrot.lane.b32.xlu0 %v485, 28
        %v1425 = vpop.permute.xlu0 %1424
        %1426 = vrot.lane.b32.xlu0 %v487, 28
        %v1427 = vpop.permute.xlu0 %1426
        %1428 = vrot.lane.b32.xlu0 %v490, 28
        %v1429 = vpop.permute.xlu0 %1428
        %1430 = vrot.lane.b32.xlu0 %v492, 28
        %v1431 = vpop.permute.xlu0 %1430
        %1432 = vrot.lane.b32.xlu0 %v495, 28
        %v1433 = vpop.permute.xlu0 %1432
        %1434 = vrot.lane.b32.xlu0 %v497, 28
        %v1435 = vpop.permute.xlu0 %1434
        %1436 = vrot.lane.b32.xlu0 %v500, 28
        %v1437 = vpop.permute.xlu0 %1436
        %1438 = vrot.lane.b32.xlu0 %v502, 28
        %v1439 = vpop.permute.xlu0 %1438
        %1440 = vrot.lane.b32.xlu0 %v505, 28
        %v1441 = vpop.permute.xlu0 %1440
        %1442 = vrot.lane.b32.xlu0 %v507, 28
        %v1443 = vpop.permute.xlu0 %1442
        %1444 = vrot.lane.b32.xlu0 %v510, 28
        %v1445 = vpop.permute.xlu0 %1444
        %1446 = vrot.lane.b32.xlu0 %v512, 28
        %v1447 = vpop.permute.xlu0 %1446
        %1448 = vrot.lane.b32.xlu0 %v515, 28
        %v1449 = vpop.permute.xlu0 %1448
        %1450 = vrot.lane.b32.xlu0 %v517, 28
        %v1451 = vpop.permute.xlu0 %1450
        %1452 = vrot.lane.b32.xlu0 %v520, 28
        %v1453 = vpop.permute.xlu0 %1452
        %1454 = vrot.lane.b32.xlu0 %v522, 28
        %v1455 = vpop.permute.xlu0 %1454
        %1456 = vrot.lane.b32.xlu0 %v525, 28
        %v1457 = vpop.permute.xlu0 %1456
        %1458 = vrot.lane.b32.xlu0 %v527, 28
        %v1459 = vpop.permute.xlu0 %1458
        %1460 = vrot.lane.b32.xlu0 %v1001, 28
        %v1461 = vpop.permute.xlu0 %1460
        %1462 = vrot.lane.b32.xlu0 %v1003, 28
        %v1463 = vpop.permute.xlu0 %1462
        %1464 = vrot.lane.b32.xlu0 %v1401, 28
        %v1465 = vpop.permute.xlu0 %1464
        %1466 = vrot.lane.b32.xlu0 %v1403, 28
        %v1467 = vpop.permute.xlu0 %1466
        %vm1500 = vcmask 261344
        %1501 = vst.msk [vmem:[#allocation3] sm:$0xff] %vm1500, %v1405
        %1502 = vst.msk [vmem:[#allocation3 + $0x8] sm:$0xff] %vm1500, %v1407
        %1503 = vst.msk [vmem:[#allocation3 + $0x10] sm:$0xff] %vm1500, %v1409
        %1504 = vst.msk [vmem:[#allocation3 + $0x18] sm:$0xff] %vm1500, %v1411
        %1505 = vst.msk [vmem:[#allocation3 + $0x20] sm:$0xff] %vm1500, %v1413
        %1506 = vst.msk [vmem:[#allocation3 + $0x28] sm:$0xff] %vm1500, %v1415
        %1507 = vst.msk [vmem:[#allocation3 + $0x30] sm:$0xff] %vm1500, %v1417
        %1508 = vst.msk [vmem:[#allocation3 + $0x38] sm:$0xff] %vm1500, %v1419
        %1509 = vst.msk [vmem:[#allocation3 + $0x40] sm:$0xff] %vm1500, %v1421
        %1510 = vst.msk [vmem:[#allocation3 + $0x48] sm:$0xff] %vm1500, %v1423
        %1511 = vst.msk [vmem:[#allocation3 + $0x50] sm:$0xff] %vm1500, %v1425
        %1512 = vst.msk [vmem:[#allocation3 + $0x58] sm:$0xff] %vm1500, %v1427
        %1513 = vst.msk [vmem:[#allocation3 + $0x60] sm:$0xff] %vm1500, %v1429
        %1514 = vst.msk [vmem:[#allocation3 + $0x68] sm:$0xff] %vm1500, %v1431
        %1515 = vst.msk [vmem:[#allocation3 + $0x70] sm:$0xff] %vm1500, %v1433
        %1516 = vst.msk [vmem:[#allocation3 + $0x78] sm:$0xff] %vm1500, %v1435
        %1517 = vst.msk [vmem:[#allocation3 + $0x80] sm:$0xff] %vm1500, %v1437
        %1518 = vst.msk [vmem:[#allocation3 + $0x88] sm:$0xff] %vm1500, %v1439
        %1519 = vst.msk [vmem:[#allocation3 + $0x90] sm:$0xff] %vm1500, %v1441
        %1520 = vst.msk [vmem:[#allocation3 + $0x98] sm:$0xff] %vm1500, %v1443
        %1521 = vst.msk [vmem:[#allocation3 + $0xa0] sm:$0xff] %vm1500, %v1445
        %1522 = vst.msk [vmem:[#allocation3 + $0xa8] sm:$0xff] %vm1500, %v1447
        %1523 = vst.msk [vmem:[#allocation3 + $0xb0] sm:$0xff] %vm1500, %v1449
        %1524 = vst.msk [vmem:[#allocation3 + $0xb8] sm:$0xff] %vm1500, %v1451
        %1525 = vst.msk [vmem:[#allocation3 + $0xc0] sm:$0xff] %vm1500, %v1453
        %1526 = vst.msk [vmem:[#allocation3 + $0xc8] sm:$0xff] %vm1500, %v1455
        %1527 = vst.msk [vmem:[#allocation3 + $0xd0] sm:$0xff] %vm1500, %v1457
        %1528 = vst.msk [vmem:[#allocation3 + $0xd8] sm:$0xff] %vm1500, %v1459
        %1529 = vst.msk [vmem:[#allocation3 + $0xe0] sm:$0xff] %vm1500, %v1461
        %1530 = vst.msk [vmem:[#allocation3 + $0xe8] sm:$0xff] %vm1500, %v1463
        %1531 = vst.msk [vmem:[#allocation3 + $0xf0] sm:$0xff] %vm1500, %v1465
        %1532 = vst.msk [vmem:[#allocation3 + $0xf8] sm:$0xff] %vm1500, %v1467
        %v1533 = vrot.slane %v364, 2
        %v1534 = vrot.slane %v365, 2
        %v1535 = vsel %vm657, %v1533, %v1534
        %v1536 = vrot.slane %v366, 2
        %v1537 = vsel %vm657, %v1534, %v1536
        %1538 = vrot.lane.b32.xlu0 %v670, 32
        %v1539 = vpop.permute.xlu0 %1538
        %1540 = vrot.lane.b32.xlu0 %v672, 32
        %v1541 = vpop.permute.xlu0 %1540
        %1542 = vrot.lane.b32.xlu0 %v675, 32
        %v1543 = vpop.permute.xlu0 %1542
        %1544 = vrot.lane.b32.xlu0 %v677, 32
        %v1545 = vpop.permute.xlu0 %1544
        %1546 = vrot.lane.b32.xlu0 %v680, 32
        %v1547 = vpop.permute.xlu0 %1546
        %1548 = vrot.lane.b32.xlu0 %v682, 32
        %v1549 = vpop.permute.xlu0 %1548
        %1550 = vrot.lane.b32.xlu0 %v685, 32
        %v1551 = vpop.permute.xlu0 %1550
        %1552 = vrot.lane.b32.xlu0 %v687, 32
        %v1553 = vpop.permute.xlu0 %1552
        %1554 = vrot.lane.b32.xlu0 %v690, 32
        %v1555 = vpop.permute.xlu0 %1554
        %1556 = vrot.lane.b32.xlu0 %v692, 32
        %v1557 = vpop.permute.xlu0 %1556
        %1558 = vrot.lane.b32.xlu0 %v695, 32
        %v1559 = vpop.permute.xlu0 %1558
        %1560 = vrot.lane.b32.xlu0 %v697, 32
        %v1561 = vpop.permute.xlu0 %1560
        %1562 = vrot.lane.b32.xlu0 %v700, 32
        %v1563 = vpop.permute.xlu0 %1562
        %1564 = vrot.lane.b32.xlu0 %v702, 32
        %v1565 = vpop.permute.xlu0 %1564
        %1566 = vrot.lane.b32.xlu0 %v705, 32
        %v1567 = vpop.permute.xlu0 %1566
        %1568 = vrot.lane.b32.xlu0 %v707, 32
        %v1569 = vpop.permute.xlu0 %1568
        %1570 = vrot.lane.b32.xlu0 %v710, 32
        %v1571 = vpop.permute.xlu0 %1570
        %1572 = vrot.lane.b32.xlu0 %v712, 32
        %v1573 = vpop.permute.xlu0 %1572
        %1574 = vrot.lane.b32.xlu0 %v715, 32
        %v1575 = vpop.permute.xlu0 %1574
        %1576 = vrot.lane.b32.xlu0 %v717, 32
        %v1577 = vpop.permute.xlu0 %1576
        %1578 = vrot.lane.b32.xlu0 %v720, 32
        %v1579 = vpop.permute.xlu0 %1578
        %1580 = vrot.lane.b32.xlu0 %v722, 32
        %v1581 = vpop.permute.xlu0 %1580
        %1582 = vrot.lane.b32.xlu0 %v725, 32
        %v1583 = vpop.permute.xlu0 %1582
        %1584 = vrot.lane.b32.xlu0 %v727, 32
        %v1585 = vpop.permute.xlu0 %1584
        %1586 = vrot.lane.b32.xlu0 %v730, 32
        %v1587 = vpop.permute.xlu0 %1586
        %1588 = vrot.lane.b32.xlu0 %v732, 32
        %v1589 = vpop.permute.xlu0 %1588
        %1590 = vrot.lane.b32.xlu0 %v735, 32
        %v1591 = vpop.permute.xlu0 %1590
        %1592 = vrot.lane.b32.xlu0 %v737, 32
        %v1593 = vpop.permute.xlu0 %1592
        %1594 = vrot.lane.b32.xlu0 %v1135, 32
        %v1595 = vpop.permute.xlu0 %1594
        %1596 = vrot.lane.b32.xlu0 %v1137, 32
        %v1597 = vpop.permute.xlu0 %1596
        %1598 = vrot.lane.b32.xlu0 %v1535, 32
        %v1599 = vpop.permute.xlu0 %1598
        %1600 = vrot.lane.b32.xlu0 %v1537, 32
        %v1601 = vpop.permute.xlu0 %1600
        %vm1634 = vcmask 294144
        %1635 = vst.msk [vmem:[#allocation3] sm:$0xff] %vm1634, %v1539
        %1636 = vst.msk [vmem:[#allocation3 + $0x8] sm:$0xff] %vm1634, %v1541
        %1637 = vst.msk [vmem:[#allocation3 + $0x10] sm:$0xff] %vm1634, %v1543
        %1638 = vst.msk [vmem:[#allocation3 + $0x18] sm:$0xff] %vm1634, %v1545
        %1639 = vst.msk [vmem:[#allocation3 + $0x20] sm:$0xff] %vm1634, %v1547
        %1640 = vst.msk [vmem:[#allocation3 + $0x28] sm:$0xff] %vm1634, %v1549
        %1641 = vst.msk [vmem:[#allocation3 + $0x30] sm:$0xff] %vm1634, %v1551
        %1642 = vst.msk [vmem:[#allocation3 + $0x38] sm:$0xff] %vm1634, %v1553
        %1643 = vst.msk [vmem:[#allocation3 + $0x40] sm:$0xff] %vm1634, %v1555
        %1644 = vst.msk [vmem:[#allocation3 + $0x48] sm:$0xff] %vm1634, %v1557
        %1645 = vst.msk [vmem:[#allocation3 + $0x50] sm:$0xff] %vm1634, %v1559
        %1646 = vst.msk [vmem:[#allocation3 + $0x58] sm:$0xff] %vm1634, %v1561
        %1647 = vst.msk [vmem:[#allocation3 + $0x60] sm:$0xff] %vm1634, %v1563
        %1648 = vst.msk [vmem:[#allocation3 + $0x68] sm:$0xff] %vm1634, %v1565
        %1649 = vst.msk [vmem:[#allocation3 + $0x70] sm:$0xff] %vm1634, %v1567
        %1650 = vst.msk [vmem:[#allocation3 + $0x78] sm:$0xff] %vm1634, %v1569
        %1651 = vst.msk [vmem:[#allocation3 + $0x80] sm:$0xff] %vm1634, %v1571
        %1652 = vst.msk [vmem:[#allocation3 + $0x88] sm:$0xff] %vm1634, %v1573
        %1653 = vst.msk [vmem:[#allocation3 + $0x90] sm:$0xff] %vm1634, %v1575
        %1654 = vst.msk [vmem:[#allocation3 + $0x98] sm:$0xff] %vm1634, %v1577
        %1655 = vst.msk [vmem:[#allocation3 + $0xa0] sm:$0xff] %vm1634, %v1579
        %1656 = vst.msk [vmem:[#allocation3 + $0xa8] sm:$0xff] %vm1634, %v1581
        %1657 = vst.msk [vmem:[#allocation3 + $0xb0] sm:$0xff] %vm1634, %v1583
        %1658 = vst.msk [vmem:[#allocation3 + $0xb8] sm:$0xff] %vm1634, %v1585
        %1659 = vst.msk [vmem:[#allocation3 + $0xc0] sm:$0xff] %vm1634, %v1587
        %1660 = vst.msk [vmem:[#allocation3 + $0xc8] sm:$0xff] %vm1634, %v1589
        %1661 = vst.msk [vmem:[#allocation3 + $0xd0] sm:$0xff] %vm1634, %v1591
        %1662 = vst.msk [vmem:[#allocation3 + $0xd8] sm:$0xff] %vm1634, %v1593
        %1663 = vst.msk [vmem:[#allocation3 + $0xe0] sm:$0xff] %vm1634, %v1595
        %1664 = vst.msk [vmem:[#allocation3 + $0xe8] sm:$0xff] %vm1634, %v1597
        %1665 = vst.msk [vmem:[#allocation3 + $0xf0] sm:$0xff] %vm1634, %v1599
        %1666 = vst.msk [vmem:[#allocation3 + $0xf8] sm:$0xff] %vm1634, %v1601
        %v1667 = vld [vmem:[%s1] sm:$0xff]
        %v1668 = vld [vmem:[#allocation3] sm:$0xff]
        %v1669 = vld [vmem:[#allocation3 + $0x8] sm:$0xff]
        %v1670 = vld [vmem:[#allocation3 + $0x10] sm:$0xff]
        %v1671 = vld [vmem:[#allocation3 + $0x18] sm:$0xff]
        %v1672 = vld [vmem:[#allocation3 + $0x20] sm:$0xff]
        %v1673 = vld [vmem:[#allocation3 + $0x28] sm:$0xff]
        %v1674 = vld [vmem:[#allocation3 + $0x30] sm:$0xff]
        %v1675 = vld [vmem:[#allocation3 + $0x38] sm:$0xff]
        %v1676 = vld [vmem:[#allocation3 + $0x40] sm:$0xff]
        %v1677 = vld [vmem:[#allocation3 + $0x48] sm:$0xff]
        %v1678 = vld [vmem:[#allocation3 + $0x50] sm:$0xff]
        %v1679 = vld [vmem:[#allocation3 + $0x58] sm:$0xff]
        %v1680 = vld [vmem:[#allocation3 + $0x60] sm:$0xff]
        %v1681 = vld [vmem:[#allocation3 + $0x68] sm:$0xff]
        %v1682 = vld [vmem:[#allocation3 + $0x70] sm:$0xff]
        %v1683 = vld [vmem:[#allocation3 + $0x78] sm:$0xff]
        %v1684 = vld [vmem:[#allocation3 + $0x80] sm:$0xff]
        %v1685 = vld [vmem:[#allocation3 + $0x88] sm:$0xff]
        %v1686 = vld [vmem:[#allocation3 + $0x90] sm:$0xff]
        %v1687 = vld [vmem:[#allocation3 + $0x98] sm:$0xff]
        %v1688 = vld [vmem:[#allocation3 + $0xa0] sm:$0xff]
        %v1689 = vld [vmem:[#allocation3 + $0xa8] sm:$0xff]
        %v1690 = vld [vmem:[#allocation3 + $0xb0] sm:$0xff]
        %v1691 = vld [vmem:[#allocation3 + $0xb8] sm:$0xff]
        %v1692 = vld [vmem:[#allocation3 + $0xc0] sm:$0xff]
        %v1693 = vld [vmem:[#allocation3 + $0xc8] sm:$0xff]
        %v1694 = vld [vmem:[#allocation3 + $0xd0] sm:$0xff]
        %v1695 = vld [vmem:[#allocation3 + $0xd8] sm:$0xff]
        %v1696 = vld [vmem:[#allocation3 + $0xe0] sm:$0xff]
        %v1697 = vld [vmem:[#allocation3 + $0xe8] sm:$0xff]
        %v1698 = vld [vmem:[#allocation3 + $0xf0] sm:$0xff]
        %v1699 = vld [vmem:[#allocation3 + $0xf8] sm:$0xff]
        %v1700 = vld [vmem:[%s2] sm:$0xff]
        %1702 = vset.pattern.permute.xlu0 0
        %1703 = vperm.xlu0 %1702, %v1700
        %v1704 = vpop.permute.xlu0 %1703
        %vm1706 = vcmask 293888
        %v1708 = vsel %vm1706, %v1667, 0
        %v1711 = vsel %vm1706, %v1668, 0
        %v1714 = vsel %vm1706, %v1669, 0
        %v1717 = vsel %vm1706, %v1670, 0
        %v1720 = vsel %vm1706, %v1671, 0
        %v1723 = vsel %vm1706, %v1672, 0
        %v1726 = vsel %vm1706, %v1673, 0
        %v1729 = vsel %vm1706, %v1674, 0
        %v1732 = vsel %vm1706, %v1675, 0
        %v1735 = vsel %vm1706, %v1676, 0
        %v1738 = vsel %vm1706, %v1677, 0
        %v1741 = vsel %vm1706, %v1678, 0
        %v1744 = vsel %vm1706, %v1679, 0
        %v1747 = vsel %vm1706, %v1680, 0
        %v1750 = vsel %vm1706, %v1681, 0
        %v1753 = vsel %vm1706, %v1682, 0
        %v1756 = vsel %vm1706, %v1683, 0
        %v1759 = vsel %vm1706, %v1684, 0
        %v1762 = vsel %vm1706, %v1685, 0
        %v1765 = vsel %vm1706, %v1686, 0
        %v1768 = vsel %vm1706, %v1687, 0
        %v1771 = vsel %vm1706, %v1688, 0
        %v1774 = vsel %vm1706, %v1689, 0
        %v1777 = vsel %vm1706, %v1690, 0
        %v1780 = vsel %vm1706, %v1691, 0
        %v1783 = vsel %vm1706, %v1692, 0
        %v1786 = vsel %vm1706, %v1693, 0
        %v1789 = vsel %vm1706, %v1694, 0
        %v1792 = vsel %vm1706, %v1695, 0
        %v1795 = vsel %vm1706, %v1696, 0
        %v1798 = vsel %vm1706, %v1697, 0
        %v1801 = vsel %vm1706, %v1698, 0
        %v1804 = vsel %vm1706, %v1699, 0
        %1806 = vmatpush.xpose.msra.mxu0 %v1756
        %1807 = vmatpush.xpose.msra.mxu0 %v1753
        %1808 = vmatpush.xpose.msra.mxu0 %v1750
        %1809 = vmatpush.xpose.msra.mxu0 %v1747
        %1810 = vmatpush.xpose.msra.mxu0 %v1744
        %1811 = vmatpush.xpose.msra.mxu0 %v1741
        %1812 = vmatpush.xpose.msra.mxu0 %v1738
        %1813 = vmatpush.xpose.msra.mxu0 %v1735
        %1814 = vmatpush.xpose.msra.mxu0 %v1732
        %1815 = vmatpush.xpose.msra.mxu0 %v1729
        %1816 = vmatpush.xpose.msra.mxu0 %v1726
        %1817 = vmatpush.xpose.msra.mxu0 %v1723
        %1818 = vmatpush.xpose.msra.mxu0 %v1720
        %1819 = vmatpush.xpose.msra.mxu0 %v1717
        %1820 = vmatpush.xpose.msra.mxu0 %v1714
        %1821 = vmatpush.xpose.msra.mxu0 %v1711
        %1822 = vmatmul.f32.gmra.mxu0 %v1708
        %v1823 = vpop.f32.mrf.mxu0
        %v1824 = vadd.f32 %v1704, %v1823
        %1825 = vdwg.mxu0
        %1826 = vmatpush.xpose.msra.mxu0 %v1804
        %1827 = vmatpush.xpose.msra.mxu0 %v1801
        %1828 = vmatpush.xpose.msra.mxu0 %v1798
        %1829 = vmatpush.xpose.msra.mxu0 %v1795
        %1830 = vmatpush.xpose.msra.mxu0 %v1792
        %1831 = vmatpush.xpose.msra.mxu0 %v1789
        %1832 = vmatpush.xpose.msra.mxu0 %v1786
        %1833 = vmatpush.xpose.msra.mxu0 %v1783
        %1834 = vmatpush.xpose.msra.mxu0 %v1780
        %1835 = vmatpush.xpose.msra.mxu0 %v1777
        %1836 = vmatpush.xpose.msra.mxu0 %v1774
        %1837 = vmatpush.xpose.msra.mxu0 %v1771
        %1838 = vmatpush.xpose.msra.mxu0 %v1768
        %1839 = vmatpush.xpose.msra.mxu0 %v1765
        %1840 = vmatpush.xpose.msra.mxu0 %v1762
        %1841 = vmatpush.xpose.msra.mxu0 %v1759
        %1842 = vmatmul.f32.gmra.mxu0 %v1708
        %v1843 = vpop.f32.mrf.mxu0
        %v1844 = vadd.f32 %v1704, %v1843
        %1845 = vdwg.mxu0
        %v1846 = vmul.f32 %v1824, 0.1
        %v1847 = vmul.f32 %v1844, 0.1
        %v1848 = vmax.f32 %v1824, %v1846
        %v1849 = vmax.f32 %v1844, %v1847
        %1850 = vst [vmem:[%s163] sm:$0xff] %v1848
        %1851 = vst [vmem:[%s163 + $0x8] sm:$0xff] %v1849
        %s1852 = sand.u32 %s93, 1
        %s1853 = scalar_lea.sflag [#allocation5], %s1852
        %s1854 = sand.u32 %s93, 1
        %s1855 = smul.addr %s1854, 16
        %s1856 = scalar_lea.vmem [#allocation4], %s1855
        // Predicated region
        $region33: #{tpu_custom_call.1} parent=31 // pred_check
          %p1857 = pneg %p103
        $region34: #{tpu_custom_call.1} parent=31 // pred_check_branch
          %1859 = sbr.rel (%p1857) target = $region36
        $region35: #{tpu_custom_call.1} parent=31 // pred_region
          %1861 = vsyncadd %s1853, 0
          %s1862 = smul.addr %s17, 2
          %s1863 = smul.addr %s1862, 8
          %s1864 = scalar_lea.hbm %s3, %s1863
          %s1866 = sshll.u32 %s1856, 4
          %s1867 = int_to_ptr.vmem [resolvable:$true] %s1866
          %s1868 = sshll.u32 %s1864, 4
          %s1869 = int_to_ptr.hbm [resolvable:$true] %s1868
          %1871 = dma.vmem_to_hbm [thread:$0]  %s1867, 256, %s1869, %s1853
        $region36: #{tpu_custom_call.1} parent=31 // pred_fallthru
          _
      $region32: #{tpu_custom_call.1} parent=5 // pred_fallthru
        _
      %p1872 = scmp.le.s32.totalorder 2, %s12
      // Predicated region
      $region37: #{tpu_custom_call.1} parent=5 // pred_check
        %p1873 = pneg %p1872
      $region38: #{tpu_custom_call.1} parent=5 // pred_check_branch
        %1875 = sbr.rel (%p1873) target = $region40
      $region39: #{tpu_custom_call.1} parent=5 // pred_region
        %s1876 = ssub.s32 %s12, 2
        // Predicated region
        $region41: #{tpu_custom_call.1} parent=39 // pred_check
          %p1877 = pneg %p109
        $region42: #{tpu_custom_call.1} parent=39 // pred_check_branch
          %1879 = sbr.rel (%p1877) target = $region44
        $region43: #{tpu_custom_call.1} parent=39 // pred_region
          %s1880 = sand.u32 %s94, 1
          %s1881 = scalar_lea.sflag [#allocation5], %s1880
          %s1882 = sand.u32 %s94, 1
          %s1883 = smul.addr %s1882, 16
          %s1884 = scalar_lea.vmem [#allocation4], %s1883
          %1886 = dma.done %s1881, 256
        $region44: #{tpu_custom_call.1} parent=39 // pred_fallthru
          _
      $region40: #{tpu_custom_call.1} parent=5 // pred_fallthru
        _
    $region6: #{tpu_custom_call.1} parent=1 // loop_footer
      %s16 = sadd.s32 1, %s12
    $region7: #{tpu_custom_call.1} parent=1 // loop_footer_branch
      %11 = sbr.rel target = $region3
    $region8: #{tpu_custom_call.1} parent=1 // loop_exit
      _
    %1887 = vsyncpa [#allocation5], 1
    %s1888 = scalar_lea.sflag [#allocation5], 1
    %1889 = vsyncpa %s1888, 1

</llo_original>
